<compile_context>
chip_gen: v7x
topology: tpu7x:2x2x1
jax: 0.10.0
libtpu: 0.0.40
codegen_flags: <defaults>
</compile_context>

<pallas_src>
import functools

import numpy as np
import jax
import jax.numpy as jnp
from jax import lax
from jax.experimental import pallas as pl
from jax.experimental.pallas import tpu as pltpu


# ------------------------------ static geometry ----------------------------- #
K = 5            # conv kernel size
H0 = W0 = 32     # input spatial size (fc1 expects conv2_out*5*5 features)
H1 = H0 // 2     # full-frame extent after pool1 (valid part is 14)
H2 = H1 // 2     # full-frame extent after pool2 (valid part is 5)
VALID2 = 5       # valid pooled extent feeding fc1


# ------------------------------ fused Pallas kernel ------------------------- #
def _fused_kernel(x_ref, wslab_ref, pslab_ref, fslab_ref, out_ref, *, dims, offs):
    B, C0, C1, C2 = dims["B"], dims["C0"], dims["C1"], dims["C2"]
    F1, F2, NOUT = dims["F1"], dims["F2"], dims["NOUT"]
    dot = functools.partial(jnp.dot, preferred_element_type=jnp.float32)

    def shift_rows(v, i):
        # v shifted up by i rows, zero-filled at the bottom.  The shifted-in rows only
        # ever feed "garbage" positions that the 0/1 selectors / zeroed fc1 rows drop,
        # and zeros keep that garbage finite (0 * garbage must never be NaN).
        if i == 0:
            return v
        return jnp.concatenate(
            [v[i:, :], jnp.zeros((i, v.shape[1]), jnp.float32)], axis=0)

    def shift_lanes(v, k):
        return jnp.concatenate(
            [v[:, k:], jnp.zeros((v.shape[0], k), jnp.float32)], axis=1)

    # ---- input relayout: (B*C0*H0, W0) NCHW rows -> slab (B*H0, C0*W0) ----------
    imgs = []
    for b in range(B):
        chans = [x_ref[pl.ds((b * C0 + c) * H0, H0), :] for c in range(C0)]
        imgs.append(jnp.concatenate(chans, axis=1))
    slab = jnp.concatenate(imgs, axis=0)                       # rows b*h, lanes c*W0+w

    # ---- conv1 (5x5 valid) + bias + ReLU: one wide-K MXU matmul -----------------
    xcat = jnp.concatenate([shift_rows(slab, i) for i in range(K)], axis=1)
    a1w = wslab_ref[pl.ds(offs["a1"], K * C0 * W0), pl.ds(0, W0 * C1)]
    b1r = wslab_ref[pl.ds(offs["b1"], 1), pl.ds(0, W0 * C1)]
    a1 = jnp.maximum(dot(xcat, a1w) + b1r, 0.0)                # (B*32, 32*C1)

    # ---- maxpool1 2x2: shifted pair-max + one row / one lane compaction matmul --
    m1 = jnp.maximum(a1, shift_rows(a1, 1))
    m1 = jnp.maximum(m1, shift_lanes(m1, C1))
    t1 = pslab_ref[pl.ds(offs["t1"], B * H1), pl.ds(0, B * H0)]
    e1 = pslab_ref[pl.ds(offs["e1"], H0 * C1), pl.ds(0, H1 * C1)]
    p1 = dot(dot(t1, m1), e1)                                  # (B*16, 16*C1)

    # ---- conv2 (5x5 valid) + bias + ReLU: one wide-K MXU matmul -----------------
    xcat2 = jnp.concatenate([shift_rows(p1, i) for i in range(K)], axis=1)
    a2w = wslab_ref[pl.ds(offs["a2"], K * H1 * C1), pl.ds(0, H1 * C2)]
    b2r = wslab_ref[pl.ds(offs["b2"], 1), pl.ds(0, H1 * C2)]
    a2 = jnp.maximum(dot(xcat2, a2w) + b2r, 0.0)               # (B*16, 16*C2)

    # ---- maxpool2 2x2 fused with fc1's row gather --------------------------------
    m2 = jnp.maximum(a2, shift_rows(a2, 1))
    m2 = jnp.maximum(m2, shift_lanes(m2, C2))
    t2 = pslab_ref[pl.ds(offs["t2"], VALID2 * B), pl.ds(0, B * H1)]
    e2 = pslab_ref[pl.ds(offs["e2"], H1 * C2), pl.ds(0, H2 * C2)]
    g = dot(dot(t2, m2), e2)                                   # (5B, 8*C2), row p*B+b

    # ---- fc1 / fc2 / fc3 ----------------------------------------------------------
    xfc = jnp.concatenate([g[p * B:(p + 1) * B, :] for p in range(VALID2)],
                          axis=1)                              # (B, 5*8*C2)
    wf1 = fslab_ref[pl.ds(offs["wf1"], VALID2 * H2 * C2), pl.ds(0, F1)]
    bf1 = fslab_ref[pl.ds(offs["bf1"], 1), pl.ds(0, F1)]
    y = jnp.maximum(dot(xfc, wf1) + bf1, 0.0)                  # (B, F1)

    wf2 = fslab_ref[pl.ds(offs["wf2"], F1), pl.ds(0, F2)]
    bf2 = fslab_ref[pl.ds(offs["bf2"], 1), pl.ds(0, F2)]
    y = jnp.maximum(dot(y, wf2) + bf2, 0.0)                    # (B, F2)

    wf3 = fslab_ref[pl.ds(offs["wf3"], F2), pl.ds(0, NOUT)]
    bf3 = fslab_ref[pl.ds(offs["bf3"], 1), pl.ds(0, NOUT)]
    out_ref[...] = (dot(y, wf3) + bf3).astype(out_ref.dtype)


# --------------------- one-time parameter preparation ----------------------- #
def _pack(entries, lane_width):
    """Row-stack 2-D matrices (8-row aligned starts) into one f32 slab."""
    offs, row = {}, 0
    for name, m in entries:
        row = -(-row // 8) * 8
        offs[name] = row
        row += m.shape[0]
    slab = np.zeros((-(-row // 8) * 8, lane_width), np.float32)
    for name, m in entries:
        slab[offs[name]:offs[name] + m.shape[0], :m.shape[1]] = m
    return slab, offs


def _build_operands(params, batch):
    """Banded/stacked conv matrices, pooling & gather selectors, flatten-order
    permuted fc1 weights -- all packed into 3 slabs.  Runs once, off the hot path."""
    w1 = np.asarray(params["w1"], np.float32)    # (5,5,C0,C1) HWIO
    b1 = np.asarray(params["b1"], np.float32)
    w2 = np.asarray(params["w2"], np.float32)    # (5,5,C1,C2)
    b2 = np.asarray(params["b2"], np.float32)
    wf1 = np.asarray(params["wf1"], np.float32)  # (C2*25, F1)
    bf1 = np.asarray(params["bf1"], np.float32)
    wf2 = np.asarray(params["wf2"], np.float32)  # (F1, F2)
    bf2 = np.asarray(params["bf2"], np.float32)
    wf3 = np.asarray(params["wf3"], np.float32)  # (F2, NOUT)
    bf3 = np.asarray(params["bf3"], np.float32)

    B = batch
    C0, C1, C2 = w1.shape[2], w1.shape[3], w2.shape[3]
    F1, F2, NOUT = wf2.shape[0], wf2.shape[1], wf3.shape[1]

    # conv1 (5 taps stacked along K): input lanes i*C0*W0 + ci*W0 + w,
    # output lanes w'*C1 + co
    a1 = np.zeros((K * C0 * W0, W0 * C1), np.float32)
    for i in range(K):
        for j in range(K):
            for ci in range(C0):
                for wc in range(W0 - j):
                    a1[i * C0 * W0 + ci * W0 + wc + j,
                       wc * C1:(wc + 1) * C1] = w1[i, j, ci]

    # conv2: input lanes i*H1*C1 + w_in*C1 + ci, output lanes w'*C2 + co
    a2 = np.zeros((K * H1 * C1, H1 * C2), np.float32)
    for i in range(K):
        for j in range(K):
            for wc in range(H1 - j):
                a2[i * H1 * C1 + (wc + j) * C1:i * H1 * C1 + (wc + j + 1) * C1,
                   wc * C2:(wc + 1) * C2] = w2[i, j]

    # pool1 row compaction (b*H1+p <- b*H0+2p) and lane compaction (q <- 2q)
    t1 = np.zeros((B * H1, B * H0), np.float32)
    for b in range(B):
        for p in range(H1):
            t1[b * H1 + p, b * H0 + 2 * p] = 1.0
    e1 = np.zeros((H0 * C1, H1 * C1), np.float32)
    for q in range(H1):
        e1[2 * q * C1:2 * q * C1 + C1, q * C1:(q + 1) * C1] = np.eye(C1)

    # pool2 row compaction fused with fc1's gather: row p*B+b <- row b*H1+2p, p<5
    t2 = np.zeros((VALID2 * B, B * H1), np.float32)
    for p in range(VALID2):
        for b in range(B):
            t2[p * B + b, b * H1 + 2 * p] = 1.0
    e2 = np.zeros((H1 * C2, H2 * C2), np.float32)
    for q in range(H2):
        e2[2 * q * C2:2 * q * C2 + C2, q * C2:(q + 1) * C2] = np.eye(C2)

    # fc1 weights permuted to the gathered-slab order (torch.flatten on NCHW:
    # feature co*25 + p*5 + q  <->  slab lane p*(H2*C2) + q*C2 + co; q>=5 rows stay 0)
    wf1s = np.zeros((VALID2 * H2 * C2, F1), np.float32)
    for p in range(VALID2):
        for q in range(VALID2):
            for co in range(C2):
                wf1s[p * H2 * C2 + q * C2 + co] = wf1[co * VALID2 * VALID2
                                                      + p * VALID2 + q]

    wslab, woffs = _pack([("a1", a1), ("a2", a2),
                          ("b1", np.tile(b1, W0)[None, :]),
                          ("b2", np.tile(b2, H1)[None, :])],
                         max(W0 * C1, H1 * C2))
    pslab, poffs = _pack([("e1", e1), ("e2", e2), ("t1", t1), ("t2", t2)],
                         max(B * H0, B * H1, H1 * C1, H2 * C2))
    fslab, foffs = _pack([("wf1", wf1s), ("bf1", bf1[None, :]),
                          ("wf2", wf2), ("bf2", bf2[None, :]),
                          ("wf3", wf3), ("bf3", bf3[None, :])],
                         max(F1, F2, NOUT))

    offs = {**woffs, **poffs, **foffs}
    dims = dict(B=B, C0=C0, C1=C1, C2=C2, F1=F1, F2=F2, NOUT=NOUT)
    slabs = tuple(jnp.asarray(s) for s in (wslab, pslab, fslab))
    return slabs, dims, offs


# ------------------------------- fused forward ------------------------------ #
def make_forward(params, batch):
    """Build packed operands once and return a jitted fused forward pass."""
    (wslab, pslab, fslab), dims, offs = _build_operands(params, batch)
    kernel = functools.partial(_fused_kernel, dims=dims, offs=offs)
    B, C0, NOUT = dims["B"], dims["C0"], dims["NOUT"]

    @jax.jit
    def forward(x_nchw):
        if x_nchw.shape != (B, C0, H0, W0):
            raise ValueError(
                f"expected input {(B, C0, H0, W0)}, got {x_nchw.shape}; the packed "
                "selectors bake in the batch size used at build time.")
        # Free row-major reshape; the NCHW->slab relayout happens inside the kernel.
        x2d = x_nchw.reshape(B * C0 * H0, W0).astype(jnp.float32)
        return pl.pallas_call(
            kernel,
            out_shape=jax.ShapeDtypeStruct((B, NOUT), jnp.float32),
            in_specs=[pl.BlockSpec(memory_space=pltpu.MemorySpace.VMEM)] * 4,
            out_specs=pl.BlockSpec(memory_space=pltpu.MemorySpace.VMEM),
        )(x2d, wslab, pslab, fslab)

    return forward


# ----------------------------- pure-JAX reference --------------------------- #
def reference_forward(x_nchw, params):
    dn = ("NHWC", "HWIO", "NHWC")
    x = jnp.transpose(x_nchw, (0, 2, 3, 1))
    x = lax.conv_general_dilated(x, params["w1"], (1, 1), "VALID",
                                 dimension_numbers=dn) + params["b1"]
    x = jax.nn.relu(x)
    x = lax.reduce_window(x, -jnp.inf, lax.max, (1, 2, 2, 1), (1, 2, 2, 1), "VALID")
    x = lax.conv_general_dilated(x, params["w2"], (1, 1), "VALID",
                                 dimension_numbers=dn) + params["b2"]
    x = jax.nn.relu(x)
    x = lax.reduce_window(x, -jnp.inf, lax.max, (1, 2, 2, 1), (1, 2, 2, 1), "VALID")
    B = x.shape[0]
    x = jnp.transpose(x, (0, 3, 1, 2)).reshape(B, -1)   # torch.flatten(x, 1) on NCHW
    x = jax.nn.relu(x @ params["wf1"] + params["bf1"])
    x = jax.nn.relu(x @ params["wf2"] + params["bf2"])
    return x @ params["wf3"] + params["bf3"]


# ----------------------------------- main ------------------------------------ #
def make_params(key, conv1_out, conv2_out, fc1_out, fc2_out):
    ks = jax.random.split(key, 10)
    s = 0.1
    return {
        # conv weights stored HWIO = (kh, kw, c_in, c_out)
        "w1": s * jax.random.normal(ks[0], (5, 5, 3, conv1_out), jnp.float32),
        "b1": s * jax.random.normal(ks[1], (conv1_out,), jnp.float32),
        "w2": s * jax.random.normal(ks[2], (5, 5, conv1_out, conv2_out), jnp.float32),
        "b2": s * jax.random.normal(ks[3], (conv2_out,), jnp.float32),
        # fc weights stored (in, out); equivalent to nn.Linear weight.T
        "wf1": s * jax.random.normal(ks[4], (conv2_out * 5 * 5, fc1_out), jnp.float32),
        "bf1": s * jax.random.normal(ks[5], (fc1_out,), jnp.float32),
        "wf2": s * jax.random.normal(ks[6], (fc1_out, fc2_out), jnp.float32),
        "bf2": s * jax.random.normal(ks[7], (fc2_out,), jnp.float32),
        "wf3": s * jax.random.normal(ks[8], (fc2_out, 3), jnp.float32),
        "bf3": s * jax.random.normal(ks[9], (3,), jnp.float32),
    }


if __name__ == "__main__":
    key = jax.random.PRNGKey(0)
    k_in, k_p = jax.random.split(key)

    conv1_out, conv2_out, fc1_out, fc2_out = 8, 16, 32, 16
    params = make_params(k_p, conv1_out, conv2_out, fc1_out, fc2_out)

    # Input must be 3x32x32 so that after two (conv k=5 + pool/2) stages the spatial
    # size is 5x5, matching fc1's expected conv2_out*5*5 features.
    x = jax.random.normal(k_in, (2, 3, 32, 32), jnp.float32)

    forward = make_forward(params, batch=x.shape[0])   # one-time weight prep

    out = jax.block_until_ready(forward(x))
    ref = jax.block_until_ready(reference_forward(x, params))

    assert out.shape == (2, 3), out.shape
    np.testing.assert_allclose(np.asarray(out), np.asarray(ref),
                               rtol=1e-3, atol=1e-3)
    print("KERNEL_OK")
</pallas_src>

<mosaic_0001>
module attributes {stable_mosaic.version = 11 : i64} {
  func.func @_fused_kernel(%arg0: memref<192x32xf32, #tpu.memory_space<vmem>>, %arg1: memref<1136x256xf32, #tpu.memory_space<vmem>>, %arg2: memref<560x128xf32, #tpu.memory_space<vmem>>, %arg3: memref<712x32xf32, #tpu.memory_space<vmem>>, %arg4: memref<2x3xf32, #tpu.memory_space<vmem>>) attributes {dimension_semantics = [], scalar_prefetch = 0 : i64, scratch_operands = 0 : i64, tpu.core_type = #tpu.core_type<tc>} {
    %c0 = arith.constant 0 : index
    %c0_0 = arith.constant 0 : index
    %0 = vector.load %arg0[%c0, %c0_0] : memref<192x32xf32, #tpu.memory_space<vmem>>, vector<32x32xf32>
    %c32 = arith.constant 32 : index
    %c0_1 = arith.constant 0 : index
    %1 = vector.load %arg0[%c32, %c0_1] : memref<192x32xf32, #tpu.memory_space<vmem>>, vector<32x32xf32>
    %c64 = arith.constant 64 : index
    %c0_2 = arith.constant 0 : index
    %2 = vector.load %arg0[%c64, %c0_2] : memref<192x32xf32, #tpu.memory_space<vmem>>, vector<32x32xf32>
    %3 = tpu.concatenate %0, %1, %2 in 1 : vector<32x32xf32>, vector<32x32xf32>, vector<32x32xf32> -> vector<32x96xf32>
    %c96 = arith.constant 96 : index
    %c0_3 = arith.constant 0 : index
    %4 = vector.load %arg0[%c96, %c0_3] : memref<192x32xf32, #tpu.memory_space<vmem>>, vector<32x32xf32>
    %c128 = arith.constant 128 : index
    %c0_4 = arith.constant 0 : index
    %5 = vector.load %arg0[%c128, %c0_4] : memref<192x32xf32, #tpu.memory_space<vmem>>, vector<32x32xf32>
    %c160 = arith.constant 160 : index
    %c0_5 = arith.constant 0 : index
    %6 = vector.load %arg0[%c160, %c0_5] : memref<192x32xf32, #tpu.memory_space<vmem>>, vector<32x32xf32>
    %7 = tpu.concatenate %4, %5, %6 in 1 : vector<32x32xf32>, vector<32x32xf32>, vector<32x32xf32> -> vector<32x96xf32>
    %8 = tpu.concatenate %3, %7 in 0 : vector<32x96xf32>, vector<32x96xf32> -> vector<64x96xf32>
    %9 = vector.extract_strided_slice %8 {offsets = [1, 0], sizes = [63, 96], strides = [1, 1]} : vector<64x96xf32> to vector<63x96xf32>
    %cst = arith.constant 0.000000e+00 : f32
    %10 = vector.broadcast %cst : f32 to vector<1x96xf32>
    %11 = tpu.concatenate %9, %10 in 0 : vector<63x96xf32>, vector<1x96xf32> -> vector<64x96xf32>
    %12 = vector.extract_strided_slice %8 {offsets = [2, 0], sizes = [62, 96], strides = [1, 1]} : vector<64x96xf32> to vector<62x96xf32>
    %cst_6 = arith.constant 0.000000e+00 : f32
    %13 = vector.broadcast %cst_6 : f32 to vector<2x96xf32>
    %14 = tpu.concatenate %12, %13 in 0 : vector<62x96xf32>, vector<2x96xf32> -> vector<64x96xf32>
    %15 = vector.extract_strided_slice %8 {offsets = [3, 0], sizes = [61, 96], strides = [1, 1]} : vector<64x96xf32> to vector<61x96xf32>
    %cst_7 = arith.constant 0.000000e+00 : f32
    %16 = vector.broadcast %cst_7 : f32 to vector<3x96xf32>
    %17 = tpu.concatenate %15, %16 in 0 : vector<61x96xf32>, vector<3x96xf32> -> vector<64x96xf32>
    %18 = vector.extract_strided_slice %8 {offsets = [4, 0], sizes = [60, 96], strides = [1, 1]} : vector<64x96xf32> to vector<60x96xf32>
    %cst_8 = arith.constant 0.000000e+00 : f32
    %19 = vector.broadcast %cst_8 : f32 to vector<4x96xf32>
    %20 = tpu.concatenate %18, %19 in 0 : vector<60x96xf32>, vector<4x96xf32> -> vector<64x96xf32>
    %21 = tpu.concatenate %8, %11, %14, %17, %20 in 1 : vector<64x96xf32>, vector<64x96xf32>, vector<64x96xf32>, vector<64x96xf32>, vector<64x96xf32> -> vector<64x480xf32>
    %c0_9 = arith.constant 0 : index
    %c0_10 = arith.constant 0 : index
    %22 = vector.load %arg1[%c0_9, %c0_10] : memref<1136x256xf32, #tpu.memory_space<vmem>>, vector<480x256xf32>
    %c1120 = arith.constant 1120 : index
    %c0_11 = arith.constant 0 : index
    %23 = vector.load %arg1[%c1120, %c0_11] : memref<1136x256xf32, #tpu.memory_space<vmem>>, vector<1x256xf32>
    %cst_12 = arith.constant dense<0.000000e+00> : vector<64x256xf32>
    %24 = tpu.matmul %21, %22, %cst_12 {dimension_numbers = #tpu.dot_dimension_numbers<[1], [0], [0], [1], [0, 0, 1, 1], [], []>} : vector<64x480xf32>, vector<480x256xf32>, vector<64x256xf32> -> vector<64x256xf32>
    %25 = vector.broadcast %23 : vector<1x256xf32> to vector<64x256xf32>
    %26 = arith.addf %24, %25 : vector<64x256xf32>
    %cst_13 = arith.constant 0.000000e+00 : f32
    %27 = vector.broadcast %cst_13 : f32 to vector<64x256xf32>
    %28 = arith.maximumf %26, %27 : vector<64x256xf32>
    %29 = vector.extract_strided_slice %28 {offsets = [1, 0], sizes = [63, 256], strides = [1, 1]} : vector<64x256xf32> to vector<63x256xf32>
    %cst_14 = arith.constant 0.000000e+00 : f32
    %30 = vector.broadcast %cst_14 : f32 to vector<1x256xf32>
    %31 = tpu.concatenate %29, %30 in 0 : vector<63x256xf32>, vector<1x256xf32> -> vector<64x256xf32>
    %32 = arith.maximumf %28, %31 : vector<64x256xf32>
    %33 = vector.extract_strided_slice %32 {offsets = [0, 8], sizes = [64, 248], strides = [1, 1]} : vector<64x256xf32> to vector<64x248xf32>
    %cst_15 = arith.constant 0.000000e+00 : f32
    %34 = vector.broadcast %cst_15 : f32 to vector<64x8xf32>
    %35 = tpu.concatenate %33, %34 in 1 : vector<64x248xf32>, vector<64x8xf32> -> vector<64x256xf32>
    %36 = arith.maximumf %32, %35 : vector<64x256xf32>
    %c512 = arith.constant 512 : index
    %c0_16 = arith.constant 0 : index
    %37 = vector.load %arg2[%c512, %c0_16] : memref<560x128xf32, #tpu.memory_space<vmem>>, vector<32x64xf32>
    %c0_17 = arith.constant 0 : index
    %c0_18 = arith.constant 0 : index
    %38 = vector.load %arg2[%c0_17, %c0_18] : memref<560x128xf32, #tpu.memory_space<vmem>>, vector<256x128xf32>
    %cst_19 = arith.constant dense<0.000000e+00> : vector<32x256xf32>
    %39 = tpu.matmul %37, %36, %cst_19 {dimension_numbers = #tpu.dot_dimension_numbers<[1], [0], [0], [1], [0, 0, 1, 1], [], []>} : vector<32x64xf32>, vector<64x256xf32>, vector<32x256xf32> -> vector<32x256xf32>
    %cst_20 = arith.constant dense<0.000000e+00> : vector<32x128xf32>
    %40 = tpu.matmul %39, %38, %cst_20 {dimension_numbers = #tpu.dot_dimension_numbers<[1], [0], [0], [1], [0, 0, 1, 1], [], []>} : vector<32x256xf32>, vector<256x128xf32>, vector<32x128xf32> -> vector<32x128xf32>
    %41 = vector.extract_strided_slice %40 {offsets = [1, 0], sizes = [31, 128], strides = [1, 1]} : vector<32x128xf32> to vector<31x128xf32>
    %cst_21 = arith.constant 0.000000e+00 : f32
    %42 = vector.broadcast %cst_21 : f32 to vector<1x128xf32>
    %43 = tpu.concatenate %41, %42 in 0 : vector<31x128xf32>, vector<1x128xf32> -> vector<32x128xf32>
    %44 = vector.extract_strided_slice %40 {offsets = [2, 0], sizes = [30, 128], strides = [1, 1]} : vector<32x128xf32> to vector<30x128xf32>
    %cst_22 = arith.constant 0.000000e+00 : f32
    %45 = vector.broadcast %cst_22 : f32 to vector<2x128xf32>
    %46 = tpu.concatenate %44, %45 in 0 : vector<30x128xf32>, vector<2x128xf32> -> vector<32x128xf32>
    %47 = vector.extract_strided_slice %40 {offsets = [3, 0], sizes = [29, 128], strides = [1, 1]} : vector<32x128xf32> to vector<29x128xf32>
    %cst_23 = arith.constant 0.000000e+00 : f32
    %48 = vector.broadcast %cst_23 : f32 to vector<3x128xf32>
    %49 = tpu.concatenate %47, %48 in 0 : vector<29x128xf32>, vector<3x128xf32> -> vector<32x128xf32>
    %50 = vector.extract_strided_slice %40 {offsets = [4, 0], sizes = [28, 128], strides = [1, 1]} : vector<32x128xf32> to vector<28x128xf32>
    %cst_24 = arith.constant 0.000000e+00 : f32
    %51 = vector.broadcast %cst_24 : f32 to vector<4x128xf32>
    %52 = tpu.concatenate %50, %51 in 0 : vector<28x128xf32>, vector<4x128xf32> -> vector<32x128xf32>
    %53 = tpu.concatenate %40, %43, %46, %49, %52 in 1 : vector<32x128xf32>, vector<32x128xf32>, vector<32x128xf32>, vector<32x128xf32>, vector<32x128xf32> -> vector<32x640xf32>
    %c480 = arith.constant 480 : index
    %c0_25 = arith.constant 0 : index
    %54 = vector.load %arg1[%c480, %c0_25] : memref<1136x256xf32, #tpu.memory_space<vmem>>, vector<640x256xf32>
    %c1128 = arith.constant 1128 : index
    %c0_26 = arith.constant 0 : index
    %55 = vector.load %arg1[%c1128, %c0_26] : memref<1136x256xf32, #tpu.memory_space<vmem>>, vector<1x256xf32>
    %cst_27 = arith.constant dense<0.000000e+00> : vector<32x256xf32>
    %56 = tpu.matmul %53, %54, %cst_27 {dimension_numbers = #tpu.dot_dimension_numbers<[1], [0], [0], [1], [0, 0, 1, 1], [], []>} : vector<32x640xf32>, vector<640x256xf32>, vector<32x256xf32> -> vector<32x256xf32>
    %57 = vector.broadcast %55 : vector<1x256xf32> to vector<32x256xf32>
    %58 = arith.addf %56, %57 : vector<32x256xf32>
    %cst_28 = arith.constant 0.000000e+00 : f32
    %59 = vector.broadcast %cst_28 : f32 to vector<32x256xf32>
    %60 = arith.maximumf %58, %59 : vector<32x256xf32>
    %61 = vector.extract_strided_slice %60 {offsets = [1, 0], sizes = [31, 256], strides = [1, 1]} : vector<32x256xf32> to vector<31x256xf32>
    %cst_29 = arith.constant 0.000000e+00 : f32
    %62 = vector.broadcast %cst_29 : f32 to vector<1x256xf32>
    %63 = tpu.concatenate %61, %62 in 0 : vector<31x256xf32>, vector<1x256xf32> -> vector<32x256xf32>
    %64 = arith.maximumf %60, %63 : vector<32x256xf32>
    %65 = vector.extract_strided_slice %64 {offsets = [0, 16], sizes = [32, 240], strides = [1, 1]} : vector<32x256xf32> to vector<32x240xf32>
    %cst_30 = arith.constant 0.000000e+00 : f32
    %66 = vector.broadcast %cst_30 : f32 to vector<32x16xf32>
    %67 = tpu.concatenate %65, %66 in 1 : vector<32x240xf32>, vector<32x16xf32> -> vector<32x256xf32>
    %68 = arith.maximumf %64, %67 : vector<32x256xf32>
    %c544 = arith.constant 544 : index
    %c0_31 = arith.constant 0 : index
    %69 = vector.load %arg2[%c544, %c0_31] : memref<560x128xf32, #tpu.memory_space<vmem>>, vector<10x32xf32>
    %c256 = arith.constant 256 : index
    %c0_32 = arith.constant 0 : index
    %70 = vector.load %arg2[%c256, %c0_32] : memref<560x128xf32, #tpu.memory_space<vmem>>, vector<256x128xf32>
    %cst_33 = arith.constant dense<0.000000e+00> : vector<10x256xf32>
    %71 = tpu.matmul %69, %68, %cst_33 {dimension_numbers = #tpu.dot_dimension_numbers<[1], [0], [0], [1], [0, 0, 1, 1], [], []>} : vector<10x32xf32>, vector<32x256xf32>, vector<10x256xf32> -> vector<10x256xf32>
    %cst_34 = arith.constant dense<0.000000e+00> : vector<10x128xf32>
    %72 = tpu.matmul %71, %70, %cst_34 {dimension_numbers = #tpu.dot_dimension_numbers<[1], [0], [0], [1], [0, 0, 1, 1], [], []>} : vector<10x256xf32>, vector<256x128xf32>, vector<10x128xf32> -> vector<10x128xf32>
    %73 = vector.extract_strided_slice %72 {offsets = [0, 0], sizes = [2, 128], strides = [1, 1]} : vector<10x128xf32> to vector<2x128xf32>
    %74 = vector.extract_strided_slice %72 {offsets = [2, 0], sizes = [2, 128], strides = [1, 1]} : vector<10x128xf32> to vector<2x128xf32>
    %75 = vector.extract_strided_slice %72 {offsets = [4, 0], sizes = [2, 128], strides = [1, 1]} : vector<10x128xf32> to vector<2x128xf32>
    %76 = vector.extract_strided_slice %72 {offsets = [6, 0], sizes = [2, 128], strides = [1, 1]} : vector<10x128xf32> to vector<2x128xf32>
    %77 = vector.extract_strided_slice %72 {offsets = [8, 0], sizes = [2, 128], strides = [1, 1]} : vector<10x128xf32> to vector<2x128xf32>
    %78 = tpu.concatenate %73, %74, %75, %76, %77 in 1 : vector<2x128xf32>, vector<2x128xf32>, vector<2x128xf32>, vector<2x128xf32>, vector<2x128xf32> -> vector<2x640xf32>
    %c0_35 = arith.constant 0 : index
    %c0_36 = arith.constant 0 : index
    %79 = vector.load %arg3[%c0_35, %c0_36] : memref<712x32xf32, #tpu.memory_space<vmem>>, vector<640x32xf32>
    %c640 = arith.constant 640 : index
    %c0_37 = arith.constant 0 : index
    %80 = vector.load %arg3[%c640, %c0_37] : memref<712x32xf32, #tpu.memory_space<vmem>>, vector<1x32xf32>
    %cst_38 = arith.constant dense<0.000000e+00> : vector<2x32xf32>
    %81 = tpu.matmul %78, %79, %cst_38 {dimension_numbers = #tpu.dot_dimension_numbers<[1], [0], [0], [1], [0, 0, 1, 1], [], []>} : vector<2x640xf32>, vector<640x32xf32>, vector<2x32xf32> -> vector<2x32xf32>
    %82 = vector.broadcast %80 : vector<1x32xf32> to vector<2x32xf32>
    %83 = arith.addf %81, %82 : vector<2x32xf32>
    %cst_39 = arith.constant 0.000000e+00 : f32
    %84 = vector.broadcast %cst_39 : f32 to vector<2x32xf32>
    %85 = arith.maximumf %83, %84 : vector<2x32xf32>
    %c648 = arith.constant 648 : index
    %c0_40 = arith.constant 0 : index
    %86 = vector.load %arg3[%c648, %c0_40] : memref<712x32xf32, #tpu.memory_space<vmem>>, vector<32x16xf32>
    %c680 = arith.constant 680 : index
    %c0_41 = arith.constant 0 : index
    %87 = vector.load %arg3[%c680, %c0_41] : memref<712x32xf32, #tpu.memory_space<vmem>>, vector<1x16xf32>
    %cst_42 = arith.constant dense<0.000000e+00> : vector<2x16xf32>
    %88 = tpu.matmul %85, %86, %cst_42 {dimension_numbers = #tpu.dot_dimension_numbers<[1], [0], [0], [1], [0, 0, 1, 1], [], []>} : vector<2x32xf32>, vector<32x16xf32>, vector<2x16xf32> -> vector<2x16xf32>
    %89 = vector.broadcast %87 : vector<1x16xf32> to vector<2x16xf32>
    %90 = arith.addf %88, %89 : vector<2x16xf32>
    %cst_43 = arith.constant 0.000000e+00 : f32
    %91 = vector.broadcast %cst_43 : f32 to vector<2x16xf32>
    %92 = arith.maximumf %90, %91 : vector<2x16xf32>
    %c688 = arith.constant 688 : index
    %c0_44 = arith.constant 0 : index
    %93 = vector.load %arg3[%c688, %c0_44] : memref<712x32xf32, #tpu.memory_space<vmem>>, vector<16x3xf32>
    %c704 = arith.constant 704 : index
    %c0_45 = arith.constant 0 : index
    %94 = vector.load %arg3[%c704, %c0_45] : memref<712x32xf32, #tpu.memory_space<vmem>>, vector<1x3xf32>
    %cst_46 = arith.constant dense<0.000000e+00> : vector<2x3xf32>
    %95 = tpu.matmul %92, %93, %cst_46 {dimension_numbers = #tpu.dot_dimension_numbers<[1], [0], [0], [1], [0, 0, 1, 1], [], []>} : vector<2x16xf32>, vector<16x3xf32>, vector<2x3xf32> -> vector<2x3xf32>
    %96 = vector.broadcast %94 : vector<1x3xf32> to vector<2x3xf32>
    %97 = arith.addf %95, %96 : vector<2x3xf32>
    %c0_47 = arith.constant 0 : index
    %c0_48 = arith.constant 0 : index
    %98 = vector.load %arg4[%c0_47, %c0_48] : memref<2x3xf32, #tpu.memory_space<vmem>>, vector<2x3xf32>
    tpu.vector_store %arg4[%c0_47, %c0_48], %97 {strides = array<i32>} : memref<2x3xf32, #tpu.memory_space<vmem>>, vector<2x3xf32>,
    return
  }
}

</mosaic_0001>

<llo_original>
// kernel: forward.1
$region0: #{forward.1}
  #allocation0 [shape = 'u32[]', space=smem, size = 0x4, offset = 0x4, fixed_abs, tag = 'smem constant byte address 0x4 - core index']
  #allocation1 [shape = 'u32[144,128]{1,0:T(1,128)}', space=vmem, size = 0x12000, scoped, tag = 'internal scratch']
  %s0 = inlined_call_operand.hbm [shape: f32[192,32], index: 0, kind: input, shape index: {}]
  %s1 = inlined_call_operand.hbm [shape: f32[1136,256], index: 1, kind: input, shape index: {}]
  %s2 = inlined_call_operand.hbm [shape: f32[560,128], index: 2, kind: input, shape index: {}]
  %s3 = inlined_call_operand.hbm [shape: f32[712,32], index: 3, kind: input, shape index: {}]
  %s4 = inlined_call_operand.hbm [shape: f32[2,3], index: 4, kind: output, shape index: {}]
  %s5 = sld [smem:[#allocation0]]
  $region42: #{forward.1} parent=0
    _
  %s7 = ssub.s32 1, %s5
  %s8 = scalar_select 0, %s7, %s5
  $region1: #{forward.1} parent=0
    #allocation2 [shape = 'u8[98304]{0}', space=vmem, size = 0x18000, scoped, tag = 'input window, operand 0, single buffered']
    #allocation3 [shape = 's32[1]{0}', space=sflag, size = 0x4, scoped, tag = 'scoped memory for forward.1']
    #allocation4 [shape = 's32[1]{0}', space=sflag, size = 0x4, scoped, tag = 'scoped memory for forward.1']
    #allocation5 [shape = 'u8[1163264]{0}', space=vmem, size = 0x11c000, scoped, tag = 'input window, operand 1, single buffered']
    #allocation6 [shape = 's32[1]{0}', space=sflag, size = 0x4, scoped, tag = 'scoped memory for forward.1']
    #allocation7 [shape = 'u8[286720]{0}', space=vmem, size = 0x46000, scoped, tag = 'input window, operand 2, single buffered']
    #allocation8 [shape = 'u8[364544]{0}', space=vmem, size = 0x59000, scoped, tag = 'input window, operand 3, single buffered']
    #allocation9 [shape = 's32[1]{0}', space=sflag, size = 0x4, scoped, tag = 'scoped memory for forward.1']
    #allocation10 [shape = 'u8[1024]{0}', space=vmem, size = 0x400, scoped, tag = 'output window, operand 0, single buffered']
    %9 = vsyncpa [#allocation3], 0
    %10 = vsyncpa [#allocation6], 0
    %11 = vsyncpa [#allocation9], 0
    %12 = vsyncpa [#allocation4], 0
    // Predicated region
    $region2: #{forward.1} parent=1 // pred_check
      _
    $region3: #{forward.1} parent=1 // pred_check_branch
      %14 = sbr.rel (0) target = $region5
    $region4: #{forward.1} parent=1 // pred_region
      %s16 = ssub.s32 3072, 3072
      %17 = vsyncadd [#allocation3], %s16
      %s18 = sshll.u32 [#allocation2], 4
      %s19 = int_to_ptr.vmem [resolvable:$true] %s18
      %24 = dma.hbm_to_vmem [thread:$0]  %s0, 3072, %s19, [#allocation3], 128, 128, 8
    $region5: #{forward.1} parent=1 // pred_fallthru
      _
    // Predicated region
    $region6: #{forward.1} parent=1 // pred_check
      _
    $region7: #{forward.1} parent=1 // pred_check_branch
      %26 = sbr.rel (0) target = $region9
    $region8: #{forward.1} parent=1 // pred_region
      %s28 = ssub.s32 36352, 36352
      %29 = vsyncadd [#allocation6], %s28
      %s30 = sshll.u32 [#allocation5], 4
      %s31 = int_to_ptr.vmem [resolvable:$true] %s30
      %36 = dma.hbm_to_vmem [thread:$0]  %s1, 36352, %s31, [#allocation6], 256, 256, 16
    $region9: #{forward.1} parent=1 // pred_fallthru
      _
    // Predicated region
    $region10: #{forward.1} parent=1 // pred_check
      _
    $region11: #{forward.1} parent=1 // pred_check_branch
      %38 = sbr.rel (0) target = $region13
    $region12: #{forward.1} parent=1 // pred_region
      %s40 = ssub.s32 8960, 8960
      %41 = vsyncadd [#allocation6], %s40
      %s42 = sshll.u32 [#allocation7], 4
      %s43 = int_to_ptr.vmem [resolvable:$true] %s42
      %48 = dma.hbm_to_vmem [thread:$0]  %s2, 8960, %s43, [#allocation6], 128, 128, 8
    $region13: #{forward.1} parent=1 // pred_fallthru
      _
    // Predicated region
    $region14: #{forward.1} parent=1 // pred_check
      _
    $region15: #{forward.1} parent=1 // pred_check_branch
      %50 = sbr.rel (0) target = $region17
    $region16: #{forward.1} parent=1 // pred_region
      %s52 = ssub.s32 11392, 11392
      %53 = vsyncadd [#allocation9], %s52
      %s54 = sshll.u32 [#allocation8], 4
      %s55 = int_to_ptr.vmem [resolvable:$true] %s54
      %60 = dma.hbm_to_vmem [thread:$0]  %s3, 11392, %s55, [#allocation9], 128, 128, 8
    $region17: #{forward.1} parent=1 // pred_fallthru
      _
    // Predicated region
    $region18: #{forward.1} parent=1 // pred_check
      _
    $region19: #{forward.1} parent=1 // pred_check_branch
      %62 = sbr.rel (0) target = $region21
    $region20: #{forward.1} parent=1 // pred_region
      %63 = dma.done [#allocation3], 3072
    $region21: #{forward.1} parent=1 // pred_fallthru
      _
    // Predicated region
    $region22: #{forward.1} parent=1 // pred_check
      _
    $region23: #{forward.1} parent=1 // pred_check_branch
      %65 = sbr.rel (0) target = $region25
    $region24: #{forward.1} parent=1 // pred_region
      %66 = dma.done [#allocation6], 36352
    $region25: #{forward.1} parent=1 // pred_fallthru
      _
    // Predicated region
    $region26: #{forward.1} parent=1 // pred_check
      _
    $region27: #{forward.1} parent=1 // pred_check_branch
      %68 = sbr.rel (0) target = $region29
    $region28: #{forward.1} parent=1 // pred_region
      %69 = dma.done [#allocation6], 8960
    $region29: #{forward.1} parent=1 // pred_fallthru
      _
    // Predicated region
    $region30: #{forward.1} parent=1 // pred_check
      _
    $region31: #{forward.1} parent=1 // pred_check_branch
      %71 = sbr.rel (0) target = $region33
    $region32: #{forward.1} parent=1 // pred_region
      %72 = dma.done [#allocation9], 11392
    $region33: #{forward.1} parent=1 // pred_fallthru
      _
    %v73 = vld [vmem:[#allocation2] sm:$0xff]
    %v74 = vld [vmem:[#allocation2 + $0x8] sm:$0xff]
    %v75 = vld [vmem:[#allocation2 + $0x10] sm:$0xff]
    %v76 = vld [vmem:[#allocation2 + $0x18] sm:$0xff]
    %v77 = vld [vmem:[#allocation2 + $0x20] sm:$0xff]
    %v78 = vld [vmem:[#allocation2 + $0x28] sm:$0xff]
    %v79 = vld [vmem:[#allocation2 + $0x30] sm:$0xff]
    %v80 = vld [vmem:[#allocation2 + $0x38] sm:$0xff]
    %v81 = vld [vmem:[#allocation2 + $0x40] sm:$0xff]
    %v82 = vld [vmem:[#allocation2 + $0x48] sm:$0xff]
    %v83 = vld [vmem:[#allocation2 + $0x50] sm:$0xff]
    %v84 = vld [vmem:[#allocation2 + $0x58] sm:$0xff]
    %89 = vrot.lane.b32.xlu0 %v77, 32
    %v90 = vpop.permute.xlu0 %89
    %91 = vrot.lane.b32.xlu0 %v78, 32
    %v92 = vpop.permute.xlu0 %91
    %93 = vrot.lane.b32.xlu0 %v79, 32
    %v94 = vpop.permute.xlu0 %93
    %95 = vrot.lane.b32.xlu0 %v80, 32
    %v96 = vpop.permute.xlu0 %95
    %105 = vrot.lane.b32.xlu0 %v81, 64
    %v106 = vpop.permute.xlu0 %105
    %107 = vrot.lane.b32.xlu0 %v82, 64
    %v108 = vpop.permute.xlu0 %107
    %109 = vrot.lane.b32.xlu0 %v83, 64
    %v110 = vpop.permute.xlu0 %109
    %111 = vrot.lane.b32.xlu0 %v84, 64
    %v112 = vpop.permute.xlu0 %111
    %vm117 = vcmask 261120
    %v118 = vsel %vm117, %v73, %v90
    %v119 = vsel %vm117, %v74, %v92
    %v120 = vsel %vm117, %v75, %v94
    %v121 = vsel %vm117, %v76, %v96
    %vm122 = vcmask 523264
    %v123 = vsel %vm122, %v118, %v106
    %v124 = vsel %vm122, %v119, %v108
    %v125 = vsel %vm122, %v120, %v110
    %v126 = vsel %vm122, %v121, %v112
    %v127 = vld [vmem:[#allocation2 + $0x60] sm:$0xff]
    %v128 = vld [vmem:[#allocation2 + $0x68] sm:$0xff]
    %v129 = vld [vmem:[#allocation2 + $0x70] sm:$0xff]
    %v130 = vld [vmem:[#allocation2 + $0x78] sm:$0xff]
    %v131 = vld [vmem:[#allocation2 + $0x80] sm:$0xff]
    %v132 = vld [vmem:[#allocation2 + $0x88] sm:$0xff]
    %v133 = vld [vmem:[#allocation2 + $0x90] sm:$0xff]
    %v134 = vld [vmem:[#allocation2 + $0x98] sm:$0xff]
    %v135 = vld [vmem:[#allocation2 + $0xa0] sm:$0xff]
    %v136 = vld [vmem:[#allocation2 + $0xa8] sm:$0xff]
    %v137 = vld [vmem:[#allocation2 + $0xb0] sm:$0xff]
    %v138 = vld [vmem:[#allocation2 + $0xb8] sm:$0xff]
    %143 = vrot.lane.b32.xlu0 %v131, 32
    %v144 = vpop.permute.xlu0 %143
    %145 = vrot.lane.b32.xlu0 %v132, 32
    %v146 = vpop.permute.xlu0 %145
    %147 = vrot.lane.b32.xlu0 %v133, 32
    %v148 = vpop.permute.xlu0 %147
    %149 = vrot.lane.b32.xlu0 %v134, 32
    %v150 = vpop.permute.xlu0 %149
    %159 = vrot.lane.b32.xlu0 %v135, 64
    %v160 = vpop.permute.xlu0 %159
    %161 = vrot.lane.b32.xlu0 %v136, 64
    %v162 = vpop.permute.xlu0 %161
    %163 = vrot.lane.b32.xlu0 %v137, 64
    %v164 = vpop.permute.xlu0 %163
    %165 = vrot.lane.b32.xlu0 %v138, 64
    %v166 = vpop.permute.xlu0 %165
    %v171 = vsel %vm117, %v127, %v144
    %v172 = vsel %vm117, %v128, %v146
    %v173 = vsel %vm117, %v129, %v148
    %v174 = vsel %vm117, %v130, %v150
    %v175 = vsel %vm122, %v171, %v160
    %v176 = vsel %vm122, %v172, %v162
    %v177 = vsel %vm122, %v173, %v164
    %v178 = vsel %vm122, %v174, %v166
    %vm187 = vcmask 1046528
    %v188 = vrot.slane %v123, 1
    %v189 = vrot.slane %v124, 1
    %v190 = vsel %vm187, %v188, %v189
    %v191 = vrot.slane %v125, 1
    %v192 = vsel %vm187, %v189, %v191
    %v193 = vrot.slane %v126, 1
    %v194 = vsel %vm187, %v191, %v193
    %v195 = vrot.slane %v175, 1
    %v196 = vsel %vm187, %v193, %v195
    %v197 = vrot.slane %v176, 1
    %v198 = vsel %vm187, %v195, %v197
    %v199 = vrot.slane %v177, 1
    %v200 = vsel %vm187, %v197, %v199
    %v201 = vrot.slane %v178, 1
    %v202 = vsel %vm187, %v199, %v201
    %v204 = vsel %vm187, %v201, 0.0
    %vm205 = vcmask 1045504
    %v206 = vrot.slane %v123, 2
    %v207 = vrot.slane %v124, 2
    %v208 = vsel %vm205, %v206, %v207
    %v209 = vrot.slane %v125, 2
    %v210 = vsel %vm205, %v207, %v209
    %v211 = vrot.slane %v126, 2
    %v212 = vsel %vm205, %v209, %v211
    %v213 = vrot.slane %v175, 2
    %v214 = vsel %vm205, %v211, %v213
    %v215 = vrot.slane %v176, 2
    %v216 = vsel %vm205, %v213, %v215
    %v217 = vrot.slane %v177, 2
    %v218 = vsel %vm205, %v215, %v217
    %v219 = vrot.slane %v178, 2
    %v220 = vsel %vm205, %v217, %v219
    %v222 = vsel %vm205, %v219, 0.0
    %vm223 = vcmask 1044480
    %v224 = vrot.slane %v123, 3
    %v225 = vrot.slane %v124, 3
    %v226 = vsel %vm223, %v224, %v225
    %v227 = vrot.slane %v125, 3
    %v228 = vsel %vm223, %v225, %v227
    %v229 = vrot.slane %v126, 3
    %v230 = vsel %vm223, %v227, %v229
    %v231 = vrot.slane %v175, 3
    %v232 = vsel %vm223, %v229, %v231
    %v233 = vrot.slane %v176, 3
    %v234 = vsel %vm223, %v231, %v233
    %v235 = vrot.slane %v177, 3
    %v236 = vsel %vm223, %v233, %v235
    %v237 = vrot.slane %v178, 3
    %v238 = vsel %vm223, %v235, %v237
    %v240 = vsel %vm223, %v237, 0.0
    %vm241 = vcmask 1043456
    %v242 = vrot.slane %v123, 4
    %v243 = vrot.slane %v124, 4
    %v244 = vsel %vm241, %v242, %v243
    %v245 = vrot.slane %v125, 4
    %v246 = vsel %vm241, %v243, %v245
    %v247 = vrot.slane %v126, 4
    %v248 = vsel %vm241, %v245, %v247
    %v249 = vrot.slane %v175, 4
    %v250 = vsel %vm241, %v247, %v249
    %v251 = vrot.slane %v176, 4
    %v252 = vsel %vm241, %v249, %v251
    %v253 = vrot.slane %v177, 4
    %v254 = vsel %vm241, %v251, %v253
    %v255 = vrot.slane %v178, 4
    %v256 = vsel %vm241, %v253, %v255
    %v258 = vsel %vm241, %v255, 0.0
    %260 = vrot.lane.b32.xlu0 %v190, 96
    %v261 = vpop.permute.xlu0 %260
    %262 = vrot.lane.b32.xlu0 %v192, 96
    %v263 = vpop.permute.xlu0 %262
    %264 = vrot.lane.b32.xlu0 %v194, 96
    %v265 = vpop.permute.xlu0 %264
    %266 = vrot.lane.b32.xlu0 %v196, 96
    %v267 = vpop.permute.xlu0 %266
    %268 = vrot.lane.b32.xlu0 %v198, 96
    %v269 = vpop.permute.xlu0 %268
    %270 = vrot.lane.b32.xlu0 %v200, 96
    %v271 = vpop.permute.xlu0 %270
    %272 = vrot.lane.b32.xlu0 %v202, 96
    %v273 = vpop.permute.xlu0 %272
    %274 = vrot.lane.b32.xlu0 %v204, 96
    %v275 = vpop.permute.xlu0 %274
    %285 = vrot.lane.b32.xlu0 %v208, 64
    %v286 = vpop.permute.xlu0 %285
    %287 = vrot.lane.b32.xlu0 %v210, 64
    %v288 = vpop.permute.xlu0 %287
    %289 = vrot.lane.b32.xlu0 %v212, 64
    %v290 = vpop.permute.xlu0 %289
    %291 = vrot.lane.b32.xlu0 %v214, 64
    %v292 = vpop.permute.xlu0 %291
    %293 = vrot.lane.b32.xlu0 %v216, 64
    %v294 = vpop.permute.xlu0 %293
    %295 = vrot.lane.b32.xlu0 %v218, 64
    %v296 = vpop.permute.xlu0 %295
    %297 = vrot.lane.b32.xlu0 %v220, 64
    %v298 = vpop.permute.xlu0 %297
    %299 = vrot.lane.b32.xlu0 %v222, 64
    %v300 = vpop.permute.xlu0 %299
    %310 = vrot.lane.b32.xlu0 %v226, 32
    %v311 = vpop.permute.xlu0 %310
    %312 = vrot.lane.b32.xlu0 %v228, 32
    %v313 = vpop.permute.xlu0 %312
    %314 = vrot.lane.b32.xlu0 %v230, 32
    %v315 = vpop.permute.xlu0 %314
    %316 = vrot.lane.b32.xlu0 %v232, 32
    %v317 = vpop.permute.xlu0 %316
    %318 = vrot.lane.b32.xlu0 %v234, 32
    %v319 = vpop.permute.xlu0 %318
    %320 = vrot.lane.b32.xlu0 %v236, 32
    %v321 = vpop.permute.xlu0 %320
    %322 = vrot.lane.b32.xlu0 %v238, 32
    %v323 = vpop.permute.xlu0 %322
    %324 = vrot.lane.b32.xlu0 %v240, 32
    %v325 = vpop.permute.xlu0 %324
    %vm334 = vcmask 785408
    %v335 = vsel %vm334, %v123, %v261
    %v336 = vsel %vm334, %v124, %v263
    %v337 = vsel %vm334, %v125, %v265
    %v338 = vsel %vm334, %v126, %v267
    %v339 = vsel %vm334, %v175, %v269
    %v340 = vsel %vm334, %v176, %v271
    %v341 = vsel %vm334, %v177, %v273
    %v342 = vsel %vm334, %v178, %v275
    %v343 = vsel %vm122, %v261, %v286
    %v344 = vsel %vm122, %v263, %v288
    %v345 = vsel %vm122, %v265, %v290
    %v346 = vsel %vm122, %v267, %v292
    %v347 = vsel %vm122, %v269, %v294
    %v348 = vsel %vm122, %v271, %v296
    %v349 = vsel %vm122, %v273, %v298
    %v350 = vsel %vm122, %v275, %v300
    %v351 = vsel %vm117, %v286, %v311
    %v352 = vsel %vm117, %v288, %v313
    %v353 = vsel %vm117, %v290, %v315
    %v354 = vsel %vm117, %v292, %v317
    %v355 = vsel %vm117, %v294, %v319
    %v356 = vsel %vm117, %v296, %v321
    %v357 = vsel %vm117, %v298, %v323
    %v358 = vsel %vm117, %v300, %v325
    %v359 = vld [vmem:[#allocation5] sm:$0xff]
    %v360 = vld [vmem:[#allocation5 + $0x8] sm:$0xff]
    %v361 = vld [vmem:[#allocation5 + $0x10] sm:$0xff]
    %v362 = vld [vmem:[#allocation5 + $0x18] sm:$0xff]
    %v363 = vld [vmem:[#allocation5 + $0x20] sm:$0xff]
    %v364 = vld [vmem:[#allocation5 + $0x28] sm:$0xff]
    %v365 = vld [vmem:[#allocation5 + $0x30] sm:$0xff]
    %v366 = vld [vmem:[#allocation5 + $0x38] sm:$0xff]
    %v367 = vld [vmem:[#allocation5 + $0x40] sm:$0xff]
    %v368 = vld [vmem:[#allocation5 + $0x48] sm:$0xff]
    %v369 = vld [vmem:[#allocation5 + $0x50] sm:$0xff]
    %v370 = vld [vmem:[#allocation5 + $0x58] sm:$0xff]
    %v371 = vld [vmem:[#allocation5 + $0x60] sm:$0xff]
    %v372 = vld [vmem:[#allocation5 + $0x68] sm:$0xff]
    %v373 = vld [vmem:[#allocation5 + $0x70] sm:$0xff]
    %v374 = vld [vmem:[#allocation5 + $0x78] sm:$0xff]
    %v375 = vld [vmem:[#allocation5 + $0x80] sm:$0xff]
    %v376 = vld [vmem:[#allocation5 + $0x88] sm:$0xff]
    %v377 = vld [vmem:[#allocation5 + $0x90] sm:$0xff]
    %v378 = vld [vmem:[#allocation5 + $0x98] sm:$0xff]
    %v379 = vld [vmem:[#allocation5 + $0xa0] sm:$0xff]
    %v380 = vld [vmem:[#allocation5 + $0xa8] sm:$0xff]
    %v381 = vld [vmem:[#allocation5 + $0xb0] sm:$0xff]
    %v382 = vld [vmem:[#allocation5 + $0xb8] sm:$0xff]
    %v383 = vld [vmem:[#allocation5 + $0xc0] sm:$0xff]
    %v384 = vld [vmem:[#allocation5 + $0xc8] sm:$0xff]
    %v385 = vld [vmem:[#allocation5 + $0xd0] sm:$0xff]
    %v386 = vld [vmem:[#allocation5 + $0xd8] sm:$0xff]
    %v387 = vld [vmem:[#allocation5 + $0xe0] sm:$0xff]
    %v388 = vld [vmem:[#allocation5 + $0xe8] sm:$0xff]
    %v389 = vld [vmem:[#allocation5 + $0xf0] sm:$0xff]
    %v390 = vld [vmem:[#allocation5 + $0xf8] sm:$0xff]
    %v391 = vld [vmem:[#allocation5 + $0x100] sm:$0xff]
    %v392 = vld [vmem:[#allocation5 + $0x108] sm:$0xff]
    %v393 = vld [vmem:[#allocation5 + $0x110] sm:$0xff]
    %v394 = vld [vmem:[#allocation5 + $0x118] sm:$0xff]
    %v395 = vld [vmem:[#allocation5 + $0x120] sm:$0xff]
    %v396 = vld [vmem:[#allocation5 + $0x128] sm:$0xff]
    %v397 = vld [vmem:[#allocation5 + $0x130] sm:$0xff]
    %v398 = vld [vmem:[#allocation5 + $0x138] sm:$0xff]
    %v399 = vld [vmem:[#allocation5 + $0x140] sm:$0xff]
    %v400 = vld [vmem:[#allocation5 + $0x148] sm:$0xff]
    %v401 = vld [vmem:[#allocation5 + $0x150] sm:$0xff]
    %v402 = vld [vmem:[#allocation5 + $0x158] sm:$0xff]
    %v403 = vld [vmem:[#allocation5 + $0x160] sm:$0xff]
    %v404 = vld [vmem:[#allocation5 + $0x168] sm:$0xff]
    %v405 = vld [vmem:[#allocation5 + $0x170] sm:$0xff]
    %v406 = vld [vmem:[#allocation5 + $0x178] sm:$0xff]
    %v407 = vld [vmem:[#allocation5 + $0x180] sm:$0xff]
    %v408 = vld [vmem:[#allocation5 + $0x188] sm:$0xff]
    %v409 = vld [vmem:[#allocation5 + $0x190] sm:$0xff]
    %v410 = vld [vmem:[#allocation5 + $0x198] sm:$0xff]
    %v411 = vld [vmem:[#allocation5 + $0x1a0] sm:$0xff]
    %v412 = vld [vmem:[#allocation5 + $0x1a8] sm:$0xff]
    %v413 = vld [vmem:[#allocation5 + $0x1b0] sm:$0xff]
    %v414 = vld [vmem:[#allocation5 + $0x1b8] sm:$0xff]
    %v415 = vld [vmem:[#allocation5 + $0x1c0] sm:$0xff]
    %v416 = vld [vmem:[#allocation5 + $0x1c8] sm:$0xff]
    %v417 = vld [vmem:[#allocation5 + $0x1d0] sm:$0xff]
    %v418 = vld [vmem:[#allocation5 + $0x1d8] sm:$0xff]
    %v419 = vld [vmem:[#allocation5 + $0x1e0] sm:$0xff]
    %v420 = vld [vmem:[#allocation5 + $0x1e8] sm:$0xff]
    %v421 = vld [vmem:[#allocation5 + $0x1f0] sm:$0xff]
    %v422 = vld [vmem:[#allocation5 + $0x1f8] sm:$0xff]
    %v423 = vld [vmem:[#allocation5 + $0x200] sm:$0xff]
    %v424 = vld [vmem:[#allocation5 + $0x208] sm:$0xff]
    %v425 = vld [vmem:[#allocation5 + $0x210] sm:$0xff]
    %v426 = vld [vmem:[#allocation5 + $0x218] sm:$0xff]
    %v427 = vld [vmem:[#allocation5 + $0x220] sm:$0xff]
    %v428 = vld [vmem:[#allocation5 + $0x228] sm:$0xff]
    %v429 = vld [vmem:[#allocation5 + $0x230] sm:$0xff]
    %v430 = vld [vmem:[#allocation5 + $0x238] sm:$0xff]
    %v431 = vld [vmem:[#allocation5 + $0x240] sm:$0xff]
    %v432 = vld [vmem:[#allocation5 + $0x248] sm:$0xff]
    %v433 = vld [vmem:[#allocation5 + $0x250] sm:$0xff]
    %v434 = vld [vmem:[#allocation5 + $0x258] sm:$0xff]
    %v435 = vld [vmem:[#allocation5 + $0x260] sm:$0xff]
    %v436 = vld [vmem:[#allocation5 + $0x268] sm:$0xff]
    %v437 = vld [vmem:[#allocation5 + $0x270] sm:$0xff]
    %v438 = vld [vmem:[#allocation5 + $0x278] sm:$0xff]
    %v439 = vld [vmem:[#allocation5 + $0x280] sm:$0xff]
    %v440 = vld [vmem:[#allocation5 + $0x288] sm:$0xff]
    %v441 = vld [vmem:[#allocation5 + $0x290] sm:$0xff]
    %v442 = vld [vmem:[#allocation5 + $0x298] sm:$0xff]
    %v443 = vld [vmem:[#allocation5 + $0x2a0] sm:$0xff]
    %v444 = vld [vmem:[#allocation5 + $0x2a8] sm:$0xff]
    %v445 = vld [vmem:[#allocation5 + $0x2b0] sm:$0xff]
    %v446 = vld [vmem:[#allocation5 + $0x2b8] sm:$0xff]
    %v447 = vld [vmem:[#allocation5 + $0x2c0] sm:$0xff]
    %v448 = vld [vmem:[#allocation5 + $0x2c8] sm:$0xff]
    %v449 = vld [vmem:[#allocation5 + $0x2d0] sm:$0xff]
    %v450 = vld [vmem:[#allocation5 + $0x2d8] sm:$0xff]
    %v451 = vld [vmem:[#allocation5 + $0x2e0] sm:$0xff]
    %v452 = vld [vmem:[#allocation5 + $0x2e8] sm:$0xff]
    %v453 = vld [vmem:[#allocation5 + $0x2f0] sm:$0xff]
    %v454 = vld [vmem:[#allocation5 + $0x2f8] sm:$0xff]
    %v455 = vld [vmem:[#allocation5 + $0x300] sm:$0xff]
    %v456 = vld [vmem:[#allocation5 + $0x308] sm:$0xff]
    %v457 = vld [vmem:[#allocation5 + $0x310] sm:$0xff]
    %v458 = vld [vmem:[#allocation5 + $0x318] sm:$0xff]
    %v459 = vld [vmem:[#allocation5 + $0x320] sm:$0xff]
    %v460 = vld [vmem:[#allocation5 + $0x328] sm:$0xff]
    %v461 = vld [vmem:[#allocation5 + $0x330] sm:$0xff]
    %v462 = vld [vmem:[#allocation5 + $0x338] sm:$0xff]
    %v463 = vld [vmem:[#allocation5 + $0x340] sm:$0xff]
    %v464 = vld [vmem:[#allocation5 + $0x348] sm:$0xff]
    %v465 = vld [vmem:[#allocation5 + $0x350] sm:$0xff]
    %v466 = vld [vmem:[#allocation5 + $0x358] sm:$0xff]
    %v467 = vld [vmem:[#allocation5 + $0x360] sm:$0xff]
    %v468 = vld [vmem:[#allocation5 + $0x368] sm:$0xff]
    %v469 = vld [vmem:[#allocation5 + $0x370] sm:$0xff]
    %v470 = vld [vmem:[#allocation5 + $0x378] sm:$0xff]
    %v471 = vld [vmem:[#allocation5 + $0x380] sm:$0xff]
    %v472 = vld [vmem:[#allocation5 + $0x388] sm:$0xff]
    %v473 = vld [vmem:[#allocation5 + $0x390] sm:$0xff]
    %v474 = vld [vmem:[#allocation5 + $0x398] sm:$0xff]
    %v475 = vld [vmem:[#allocation5 + $0x3a0] sm:$0xff]
    %v476 = vld [vmem:[#allocation5 + $0x3a8] sm:$0xff]
    %v477 = vld [vmem:[#allocation5 + $0x3b0] sm:$0xff]
    %v478 = vld [vmem:[#allocation5 + $0x3b8] sm:$0xff]
    %s479 = scalar_lea.vmem [#allocation5], 2240
    %v480 = vld [vmem:[%s479] ss:$8 sm:$0x3]
    %v482 = vlaneseq
    %v483 = vshrl.u32 %v482, 7
    %v484 = vsub.s32 0, %v483
    %v485 = vrot.slane %v480, %v484
    %v486 = vlaneseq
    %v487 = vshrl.u32 %v486, 7
    %v488 = vsub.s32 1, %v487
    %v489 = vrot.slane %v480, %v488
    %v492 = vsel %vm334, %v244, 0
    %v494 = vsel %vm334, %v246, 0
    %v496 = vsel %vm334, %v248, 0
    %v498 = vsel %vm334, %v250, 0
    %v500 = vsel %vm334, %v252, 0
    %v502 = vsel %vm334, %v254, 0
    %v504 = vsel %vm334, %v256, 0
    %v507 = vsel %vm334, %v258, 0
    %509 = vmatprep.subr.mxu0 %v360
    %510 = vmatpush1.msra.mxu0 %v359
    %511 = vmatprep.subr.mxu0 %v362
    %512 = vmatpush1.msra.mxu0 %v361
    %513 = vmatprep.subr.mxu0 %v364
    %514 = vmatpush1.msra.mxu0 %v363
    %515 = vmatprep.subr.mxu0 %v366
    %516 = vmatpush1.msra.mxu0 %v365
    %517 = vmatprep.subr.mxu0 %v368
    %518 = vmatpush1.msra.mxu0 %v367
    %519 = vmatprep.subr.mxu0 %v370
    %520 = vmatpush1.msra.mxu0 %v369
    %521 = vmatprep.subr.mxu0 %v372
    %522 = vmatpush1.msra.mxu0 %v371
    %523 = vmatprep.subr.mxu0 %v374
    %524 = vmatpush1.msra.mxu0 %v373
    %525 = vmatprep.subr.mxu0 %v376
    %526 = vmatpush1.msra.mxu0 %v375
    %527 = vmatprep.subr.mxu0 %v378
    %528 = vmatpush1.msra.mxu0 %v377
    %529 = vmatprep.subr.mxu0 %v380
    %530 = vmatpush1.msra.mxu0 %v379
    %531 = vmatprep.subr.mxu0 %v382
    %532 = vmatpush1.msra.mxu0 %v381
    %533 = vmatprep.subr.mxu0 %v384
    %534 = vmatpush1.msra.mxu0 %v383
    %535 = vmatprep.subr.mxu0 %v386
    %536 = vmatpush1.msra.mxu0 %v385
    %537 = vmatprep.subr.mxu0 %v388
    %538 = vmatpush1.msra.mxu0 %v387
    %539 = vmatprep.subr.mxu0 %v390
    %540 = vmatpush1.msra.mxu0 %v389
    %541 = vmatprep.subr.mxu0 %v392
    %542 = vmatpush1.msra.mxu0 %v391
    %543 = vmatprep.subr.mxu0 %v394
    %544 = vmatpush1.msra.mxu0 %v393
    %545 = vmatprep.subr.mxu0 %v396
    %546 = vmatpush1.msra.mxu0 %v395
    %547 = vmatprep.subr.mxu0 %v398
    %548 = vmatpush1.msra.mxu0 %v397
    %549 = vmatprep.subr.mxu0 %v400
    %550 = vmatpush1.msra.mxu0 %v399
    %551 = vmatprep.subr.mxu0 %v402
    %552 = vmatpush1.msra.mxu0 %v401
    %553 = vmatprep.subr.mxu0 %v404
    %554 = vmatpush1.msra.mxu0 %v403
    %555 = vmatprep.subr.mxu0 %v406
    %556 = vmatpush1.msra.mxu0 %v405
    %557 = vmatprep.subr.mxu0 %v408
    %558 = vmatpush1.msra.mxu0 %v407
    %559 = vmatprep.subr.mxu0 %v410
    %560 = vmatpush1.msra.mxu0 %v409
    %561 = vmatprep.subr.mxu0 %v412
    %562 = vmatpush1.msra.mxu0 %v411
    %563 = vmatprep.subr.mxu0 %v414
    %564 = vmatpush1.msra.mxu0 %v413
    %565 = vmatprep.subr.mxu0 %v416
    %566 = vmatpush1.msra.mxu0 %v415
    %567 = vmatprep.subr.mxu0 %v418
    %568 = vmatpush1.msra.mxu0 %v417
    %569 = vmatprep.subr.mxu0 %v420
    %570 = vmatpush1.msra.mxu0 %v419
    %571 = vmatprep.subr.mxu0 %v422
    %572 = vmatpush1.msra.mxu0 %v421
    %573 = vmatprep.mubr.f32.mxu0 %v343
    %574 = vmatmul.mubr.f32.gmra.mrb[0].mxu0 %v335
    %v575 = vpop.f32.mrb[0].mxu0
    %v576 = vadd.f32 %v485, %v575
    %v577 = vpop.f32.mrb[0].mxu0
    %v578 = vadd.f32 %v489, %v577
    %579 = vmatprep.mubr.f32.mxu0 %v344
    %580 = vmatmul.mubr.f32.gmra.mrb[0].mxu0 %v336
    %v581 = vpop.f32.mrb[0].mxu0
    %v582 = vadd.f32 %v485, %v581
    %v583 = vpop.f32.mrb[0].mxu0
    %v584 = vadd.f32 %v489, %v583
    %585 = vmatprep.mubr.f32.mxu0 %v345
    %586 = vmatmul.mubr.f32.gmra.mrb[0].mxu0 %v337
    %v587 = vpop.f32.mrb[0].mxu0
    %v588 = vadd.f32 %v485, %v587
    %v589 = vpop.f32.mrb[0].mxu0
    %v590 = vadd.f32 %v489, %v589
    %591 = vmatprep.mubr.f32.mxu0 %v346
    %592 = vmatmul.mubr.f32.gmra.mrb[0].mxu0 %v338
    %v593 = vpop.f32.mrb[0].mxu0
    %v594 = vadd.f32 %v485, %v593
    %v595 = vpop.f32.mrb[0].mxu0
    %v596 = vadd.f32 %v489, %v595
    %597 = vmatprep.mubr.f32.mxu0 %v347
    %598 = vmatmul.mubr.f32.gmra.mrb[0].mxu0 %v339
    %v599 = vpop.f32.mrb[0].mxu0
    %v600 = vadd.f32 %v485, %v599
    %v601 = vpop.f32.mrb[0].mxu0
    %v602 = vadd.f32 %v489, %v601
    %603 = vmatprep.mubr.f32.mxu0 %v348
    %604 = vmatmul.mubr.f32.gmra.mrb[0].mxu0 %v340
    %v605 = vpop.f32.mrb[0].mxu0
    %v606 = vadd.f32 %v485, %v605
    %v607 = vpop.f32.mrb[0].mxu0
    %v608 = vadd.f32 %v489, %v607
    %609 = vmatprep.mubr.f32.mxu0 %v349
    %610 = vmatmul.mubr.f32.gmra.mrb[0].mxu0 %v341
    %v611 = vpop.f32.mrb[0].mxu0
    %v612 = vadd.f32 %v485, %v611
    %v613 = vpop.f32.mrb[0].mxu0
    %v614 = vadd.f32 %v489, %v613
    %615 = vmatprep.mubr.f32.mxu0 %v350
    %616 = vmatmul.mubr.f32.gmra.mrb[0].mxu0 %v342
    %v617 = vpop.f32.mrb[0].mxu0
    %v618 = vadd.f32 %v485, %v617
    %v619 = vpop.f32.mrb[0].mxu0
    %v620 = vadd.f32 %v489, %v619
    %621 = vdwg.mxu0
    %622 = vmatprep.subr.mxu0 %v424
    %623 = vmatpush1.msra.mxu0 %v423
    %624 = vmatprep.subr.mxu0 %v426
    %625 = vmatpush1.msra.mxu0 %v425
    %626 = vmatprep.subr.mxu0 %v428
    %627 = vmatpush1.msra.mxu0 %v427
    %628 = vmatprep.subr.mxu0 %v430
    %629 = vmatpush1.msra.mxu0 %v429
    %630 = vmatprep.subr.mxu0 %v432
    %631 = vmatpush1.msra.mxu0 %v431
    %632 = vmatprep.subr.mxu0 %v434
    %633 = vmatpush1.msra.mxu0 %v433
    %634 = vmatprep.subr.mxu0 %v436
    %635 = vmatpush1.msra.mxu0 %v435
    %636 = vmatprep.subr.mxu0 %v438
    %637 = vmatpush1.msra.mxu0 %v437
    %638 = vmatprep.subr.mxu0 %v440
    %639 = vmatpush1.msra.mxu0 %v439
    %640 = vmatprep.subr.mxu0 %v442
    %641 = vmatpush1.msra.mxu0 %v441
    %642 = vmatprep.subr.mxu0 %v444
    %643 = vmatpush1.msra.mxu0 %v443
    %644 = vmatprep.subr.mxu0 %v446
    %645 = vmatpush1.msra.mxu0 %v445
    %646 = vmatprep.subr.mxu0 %v448
    %647 = vmatpush1.msra.mxu0 %v447
    %648 = vmatprep.subr.mxu0 %v450
    %649 = vmatpush1.msra.mxu0 %v449
    %650 = vmatprep.subr.mxu0 %v452
    %651 = vmatpush1.msra.mxu0 %v451
    %652 = vmatprep.subr.mxu0 %v454
    %653 = vmatpush1.msra.mxu0 %v453
    %654 = vmatprep.subr.mxu0 %v456
    %655 = vmatpush1.msra.mxu0 %v455
    %656 = vmatprep.subr.mxu0 %v458
    %657 = vmatpush1.msra.mxu0 %v457
    %658 = vmatprep.subr.mxu0 %v460
    %659 = vmatpush1.msra.mxu0 %v459
    %660 = vmatprep.subr.mxu0 %v462
    %661 = vmatpush1.msra.mxu0 %v461
    %662 = vmatprep.subr.mxu0 %v464
    %663 = vmatpush1.msra.mxu0 %v463
    %664 = vmatprep.subr.mxu0 %v466
    %665 = vmatpush1.msra.mxu0 %v465
    %666 = vmatprep.subr.mxu0 %v468
    %667 = vmatpush1.msra.mxu0 %v467
    %668 = vmatprep.subr.mxu0 %v470
    %669 = vmatpush1.msra.mxu0 %v469
    %670 = vmatprep.subr.mxu0 %v472
    %671 = vmatpush1.msra.mxu0 %v471
    %672 = vmatprep.subr.mxu0 %v474
    %673 = vmatpush1.msra.mxu0 %v473
    %674 = vmatprep.subr.mxu0 %v476
    %675 = vmatpush1.msra.mxu0 %v475
    %676 = vmatprep.subr.mxu0 %v478
    %677 = vmatpush1.msra.mxu0 %v477
    %678 = vmatprep.subr.mxu0 0.0
    %679 = vmatpush1.msra.mxu0 0.0
    %680 = vmatprep.subr.mxu0 0.0
    %681 = vmatpush1.msra.mxu0 0.0
    %682 = vmatprep.subr.mxu0 0.0
    %683 = vmatpush1.msra.mxu0 0.0
    %684 = vmatprep.subr.mxu0 0.0
    %685 = vmatpush1.msra.mxu0 0.0
    %686 = vmatprep.mubr.f32.mxu0 %v492
    %687 = vmatmul.mubr.f32.gmra.mrb[0].mxu0 %v351
    %v688 = vpop.f32.mrb[0].mxu0
    %v689 = vadd.f32 %v576, %v688
    %v690 = vpop.f32.mrb[0].mxu0
    %v691 = vadd.f32 %v578, %v690
    %692 = vmatprep.mubr.f32.mxu0 %v494
    %693 = vmatmul.mubr.f32.gmra.mrb[0].mxu0 %v352
    %v694 = vpop.f32.mrb[0].mxu0
    %v695 = vadd.f32 %v582, %v694
    %v696 = vpop.f32.mrb[0].mxu0
    %v697 = vadd.f32 %v584, %v696
    %698 = vmatprep.mubr.f32.mxu0 %v496
    %699 = vmatmul.mubr.f32.gmra.mrb[0].mxu0 %v353
    %v700 = vpop.f32.mrb[0].mxu0
    %v701 = vadd.f32 %v588, %v700
    %v702 = vpop.f32.mrb[0].mxu0
    %v703 = vadd.f32 %v590, %v702
    %704 = vmatprep.mubr.f32.mxu0 %v498
    %705 = vmatmul.mubr.f32.gmra.mrb[0].mxu0 %v354
    %v706 = vpop.f32.mrb[0].mxu0
    %v707 = vadd.f32 %v594, %v706
    %v708 = vpop.f32.mrb[0].mxu0
    %v709 = vadd.f32 %v596, %v708
    %710 = vmatprep.mubr.f32.mxu0 %v500
    %711 = vmatmul.mubr.f32.gmra.mrb[0].mxu0 %v355
    %v712 = vpop.f32.mrb[0].mxu0
    %v713 = vadd.f32 %v600, %v712
    %v714 = vpop.f32.mrb[0].mxu0
    %v715 = vadd.f32 %v602, %v714
    %716 = vmatprep.mubr.f32.mxu0 %v502
    %717 = vmatmul.mubr.f32.gmra.mrb[0].mxu0 %v356
    %v718 = vpop.f32.mrb[0].mxu0
    %v719 = vadd.f32 %v606, %v718
    %v720 = vpop.f32.mrb[0].mxu0
    %v721 = vadd.f32 %v608, %v720
    %722 = vmatprep.mubr.f32.mxu0 %v504
    %723 = vmatmul.mubr.f32.gmra.mrb[0].mxu0 %v357
    %v724 = vpop.f32.mrb[0].mxu0
    %v725 = vadd.f32 %v612, %v724
    %v726 = vpop.f32.mrb[0].mxu0
    %v727 = vadd.f32 %v614, %v726
    %728 = vmatprep.mubr.f32.mxu0 %v507
    %729 = vmatmul.mubr.f32.gmra.mrb[0].mxu0 %v358
    %v730 = vpop.f32.mrb[0].mxu0
    %v731 = vadd.f32 %v618, %v730
    %v732 = vpop.f32.mrb[0].mxu0
    %v733 = vadd.f32 %v620, %v732
    %734 = vdwg.mxu0
    %v735 = vmax.f32 %v689, 0.0
    %v736 = vmax.f32 %v691, 0.0
    %v737 = vmax.f32 %v695, 0.0
    %v738 = vmax.f32 %v697, 0.0
    %v739 = vmax.f32 %v701, 0.0
    %v740 = vmax.f32 %v703, 0.0
    %v741 = vmax.f32 %v707, 0.0
    %v742 = vmax.f32 %v709, 0.0
    %v743 = vmax.f32 %v713, 0.0
    %v744 = vmax.f32 %v715, 0.0
    %v745 = vmax.f32 %v719, 0.0
    %v746 = vmax.f32 %v721, 0.0
    %v747 = vmax.f32 %v725, 0.0
    %v748 = vmax.f32 %v727, 0.0
    %v749 = vmax.f32 %v731, 0.0
    %v750 = vmax.f32 %v733, 0.0
    %v767 = vrot.slane %v735, 1
    %v768 = vrot.slane %v737, 1
    %v769 = vsel %vm187, %v767, %v768
    %v770 = vrot.slane %v736, 1
    %v771 = vrot.slane %v738, 1
    %v772 = vsel %vm187, %v770, %v771
    %v773 = vrot.slane %v739, 1
    %v774 = vsel %vm187, %v768, %v773
    %v775 = vrot.slane %v740, 1
    %v776 = vsel %vm187, %v771, %v775
    %v777 = vrot.slane %v741, 1
    %v778 = vsel %vm187, %v773, %v777
    %v779 = vrot.slane %v742, 1
    %v780 = vsel %vm187, %v775, %v779
    %v781 = vrot.slane %v743, 1
    %v782 = vsel %vm187, %v777, %v781
    %v783 = vrot.slane %v744, 1
    %v784 = vsel %vm187, %v779, %v783
    %v785 = vrot.slane %v745, 1
    %v786 = vsel %vm187, %v781, %v785
    %v787 = vrot.slane %v746, 1
    %v788 = vsel %vm187, %v783, %v787
    %v789 = vrot.slane %v747, 1
    %v790 = vsel %vm187, %v785, %v789
    %v791 = vrot.slane %v748, 1
    %v792 = vsel %vm187, %v787, %v791
    %v793 = vrot.slane %v749, 1
    %v794 = vsel %vm187, %v789, %v793
    %v795 = vrot.slane %v750, 1
    %v796 = vsel %vm187, %v791, %v795
    %v813 = vsel %vm187, %v793, 0.0
    %v814 = vsel %vm187, %v795, 0.0
    %v815 = vmax.f32 %v735, %v769
    %v816 = vmax.f32 %v736, %v772
    %v817 = vmax.f32 %v737, %v774
    %v818 = vmax.f32 %v738, %v776
    %v819 = vmax.f32 %v739, %v778
    %v820 = vmax.f32 %v740, %v780
    %v821 = vmax.f32 %v741, %v782
    %v822 = vmax.f32 %v742, %v784
    %v823 = vmax.f32 %v743, %v786
    %v824 = vmax.f32 %v744, %v788
    %v825 = vmax.f32 %v745, %v790
    %v826 = vmax.f32 %v746, %v792
    %v827 = vmax.f32 %v747, %v794
    %v828 = vmax.f32 %v748, %v796
    %v829 = vmax.f32 %v749, %v813
    %v830 = vmax.f32 %v750, %v814
    %847 = vrot.lane.b32.xlu0 %v815, 120
    %v848 = vpop.permute.xlu0 %847
    %849 = vrot.lane.b32.xlu0 %v816, 120
    %v850 = vpop.permute.xlu0 %849
    %851 = vrot.lane.b32.xlu0 %v817, 120
    %v852 = vpop.permute.xlu0 %851
    %853 = vrot.lane.b32.xlu0 %v818, 120
    %v854 = vpop.permute.xlu0 %853
    %855 = vrot.lane.b32.xlu0 %v819, 120
    %v856 = vpop.permute.xlu0 %855
    %857 = vrot.lane.b32.xlu0 %v820, 120
    %v858 = vpop.permute.xlu0 %857
    %859 = vrot.lane.b32.xlu0 %v821, 120
    %v860 = vpop.permute.xlu0 %859
    %861 = vrot.lane.b32.xlu0 %v822, 120
    %v862 = vpop.permute.xlu0 %861
    %863 = vrot.lane.b32.xlu0 %v823, 120
    %v864 = vpop.permute.xlu0 %863
    %865 = vrot.lane.b32.xlu0 %v824, 120
    %v866 = vpop.permute.xlu0 %865
    %867 = vrot.lane.b32.xlu0 %v825, 120
    %v868 = vpop.permute.xlu0 %867
    %869 = vrot.lane.b32.xlu0 %v826, 120
    %v870 = vpop.permute.xlu0 %869
    %871 = vrot.lane.b32.xlu0 %v827, 120
    %v872 = vpop.permute.xlu0 %871
    %873 = vrot.lane.b32.xlu0 %v828, 120
    %v874 = vpop.permute.xlu0 %873
    %875 = vrot.lane.b32.xlu0 %v829, 120
    %v876 = vpop.permute.xlu0 %875
    %877 = vrot.lane.b32.xlu0 %v830, 120
    %v878 = vpop.permute.xlu0 %877
    %vm879 = vcmask 982016
    %v880 = vsel %vm879, %v848, %v850
    %v881 = vsel %vm879, %v852, %v854
    %v882 = vsel %vm879, %v856, %v858
    %v883 = vsel %vm879, %v860, %v862
    %v884 = vsel %vm879, %v864, %v866
    %v885 = vsel %vm879, %v868, %v870
    %v886 = vsel %vm879, %v872, %v874
    %v887 = vsel %vm879, %v876, %v878
    %v904 = vsel %vm879, %v850, 0.0
    %v905 = vsel %vm879, %v854, 0.0
    %v906 = vsel %vm879, %v858, 0.0
    %v907 = vsel %vm879, %v862, 0.0
    %v908 = vsel %vm879, %v866, 0.0
    %v909 = vsel %vm879, %v870, 0.0
    %v910 = vsel %vm879, %v874, 0.0
    %v911 = vsel %vm879, %v878, 0.0
    %v912 = vmax.f32 %v815, %v880
    %v913 = vmax.f32 %v816, %v904
    %v914 = vmax.f32 %v817, %v881
    %v915 = vmax.f32 %v818, %v905
    %v916 = vmax.f32 %v819, %v882
    %v917 = vmax.f32 %v820, %v906
    %v918 = vmax.f32 %v821, %v883
    %v919 = vmax.f32 %v822, %v907
    %v920 = vmax.f32 %v823, %v884
    %v921 = vmax.f32 %v824, %v908
    %v922 = vmax.f32 %v825, %v885
    %v923 = vmax.f32 %v826, %v909
    %v924 = vmax.f32 %v827, %v886
    %v925 = vmax.f32 %v828, %v910
    %v926 = vmax.f32 %v829, %v887
    %v927 = vmax.f32 %v830, %v911
    %v928 = vld [vmem:[#allocation7 + $0x200] sm:$0xff]
    %v929 = vld [vmem:[#allocation7 + $0x208] sm:$0xff]
    %v930 = vld [vmem:[#allocation7 + $0x210] sm:$0xff]
    %v931 = vld [vmem:[#allocation7 + $0x218] sm:$0xff]
    %v932 = vld [vmem:[#allocation7] sm:$0xff]
    %v933 = vld [vmem:[#allocation7 + $0x8] sm:$0xff]
    %v934 = vld [vmem:[#allocation7 + $0x10] sm:$0xff]
    %v935 = vld [vmem:[#allocation7 + $0x18] sm:$0xff]
    %v936 = vld [vmem:[#allocation7 + $0x20] sm:$0xff]
    %v937 = vld [vmem:[#allocation7 + $0x28] sm:$0xff]
    %v938 = vld [vmem:[#allocation7 + $0x30] sm:$0xff]
    %v939 = vld [vmem:[#allocation7 + $0x38] sm:$0xff]
    %v940 = vld [vmem:[#allocation7 + $0x40] sm:$0xff]
    %v941 = vld [vmem:[#allocation7 + $0x48] sm:$0xff]
    %v942 = vld [vmem:[#allocation7 + $0x50] sm:$0xff]
    %v943 = vld [vmem:[#allocation7 + $0x58] sm:$0xff]
    %v944 = vld [vmem:[#allocation7 + $0x60] sm:$0xff]
    %v945 = vld [vmem:[#allocation7 + $0x68] sm:$0xff]
    %v946 = vld [vmem:[#allocation7 + $0x70] sm:$0xff]
    %v947 = vld [vmem:[#allocation7 + $0x78] sm:$0xff]
    %v948 = vld [vmem:[#allocation7 + $0x80] sm:$0xff]
    %v949 = vld [vmem:[#allocation7 + $0x88] sm:$0xff]
    %v950 = vld [vmem:[#allocation7 + $0x90] sm:$0xff]
    %v951 = vld [vmem:[#allocation7 + $0x98] sm:$0xff]
    %v952 = vld [vmem:[#allocation7 + $0xa0] sm:$0xff]
    %v953 = vld [vmem:[#allocation7 + $0xa8] sm:$0xff]
    %v954 = vld [vmem:[#allocation7 + $0xb0] sm:$0xff]
    %v955 = vld [vmem:[#allocation7 + $0xb8] sm:$0xff]
    %v956 = vld [vmem:[#allocation7 + $0xc0] sm:$0xff]
    %v957 = vld [vmem:[#allocation7 + $0xc8] sm:$0xff]
    %v958 = vld [vmem:[#allocation7 + $0xd0] sm:$0xff]
    %v959 = vld [vmem:[#allocation7 + $0xd8] sm:$0xff]
    %v960 = vld [vmem:[#allocation7 + $0xe0] sm:$0xff]
    %v961 = vld [vmem:[#allocation7 + $0xe8] sm:$0xff]
    %v962 = vld [vmem:[#allocation7 + $0xf0] sm:$0xff]
    %v963 = vld [vmem:[#allocation7 + $0xf8] sm:$0xff]
    %v965 = vsel %vm122, %v928, 0
    %v968 = vsel %vm122, %v929, 0
    %v971 = vsel %vm122, %v930, 0
    %v974 = vsel %vm122, %v931, 0
    %976 = vmatprep.subr.mxu0 %v913
    %977 = vmatpush1.msra.mxu0 %v912
    %978 = vmatprep.subr.mxu0 %v915
    %979 = vmatpush1.msra.mxu0 %v914
    %980 = vmatprep.subr.mxu0 %v917
    %981 = vmatpush1.msra.mxu0 %v916
    %982 = vmatprep.subr.mxu0 %v919
    %983 = vmatpush1.msra.mxu0 %v918
    %984 = vmatprep.subr.mxu0 %v921
    %985 = vmatpush1.msra.mxu0 %v920
    %986 = vmatprep.subr.mxu0 %v923
    %987 = vmatpush1.msra.mxu0 %v922
    %988 = vmatprep.subr.mxu0 %v925
    %989 = vmatpush1.msra.mxu0 %v924
    %990 = vmatprep.subr.mxu0 %v927
    %991 = vmatpush1.msra.mxu0 %v926
    %992 = vmatprep.subr.mxu0 0.0
    %993 = vmatpush1.msra.mxu0 0.0
    %994 = vmatprep.subr.mxu0 0.0
    %995 = vmatpush1.msra.mxu0 0.0
    %996 = vmatprep.subr.mxu0 0.0
    %997 = vmatpush1.msra.mxu0 0.0
    %998 = vmatprep.subr.mxu0 0.0
    %999 = vmatpush1.msra.mxu0 0.0
    %1000 = vmatprep.subr.mxu0 0.0
    %1001 = vmatpush1.msra.mxu0 0.0
    %1002 = vmatprep.subr.mxu0 0.0
    %1003 = vmatpush1.msra.mxu0 0.0
    %1004 = vmatprep.subr.mxu0 0.0
    %1005 = vmatpush1.msra.mxu0 0.0
    %1006 = vmatprep.subr.mxu0 0.0
    %1007 = vmatpush1.msra.mxu0 0.0
    %1008 = vmatprep.subr.mxu0 0.0
    %1009 = vmatpush1.msra.mxu0 0.0
    %1010 = vmatprep.subr.mxu0 0.0
    %1011 = vmatpush1.msra.mxu0 0.0
    %1012 = vmatprep.subr.mxu0 0.0
    %1013 = vmatpush1.msra.mxu0 0.0
    %1014 = vmatprep.subr.mxu0 0.0
    %1015 = vmatpush1.msra.mxu0 0.0
    %1016 = vmatprep.subr.mxu0 0.0
    %1017 = vmatpush1.msra.mxu0 0.0
    %1018 = vmatprep.subr.mxu0 0.0
    %1019 = vmatpush1.msra.mxu0 0.0
    %1020 = vmatprep.subr.mxu0 0.0
    %1021 = vmatpush1.msra.mxu0 0.0
    %1022 = vmatprep.subr.mxu0 0.0
    %1023 = vmatpush1.msra.mxu0 0.0
    %1024 = vmatprep.subr.mxu0 0.0
    %1025 = vmatpush1.msra.mxu0 0.0
    %1026 = vmatprep.subr.mxu0 0.0
    %1027 = vmatpush1.msra.mxu0 0.0
    %1028 = vmatprep.subr.mxu0 0.0
    %1029 = vmatpush1.msra.mxu0 0.0
    %1030 = vmatprep.subr.mxu0 0.0
    %1031 = vmatpush1.msra.mxu0 0.0
    %1032 = vmatprep.subr.mxu0 0.0
    %1033 = vmatpush1.msra.mxu0 0.0
    %1034 = vmatprep.subr.mxu0 0.0
    %1035 = vmatpush1.msra.mxu0 0.0
    %1036 = vmatprep.subr.mxu0 0.0
    %1037 = vmatpush1.msra.mxu0 0.0
    %1038 = vmatprep.subr.mxu0 0.0
    %1039 = vmatpush1.msra.mxu0 0.0
    %1040 = vmatprep.mubr.f32.mxu0 0.0
    %1041 = vmatmul.mubr.f32.gmra.mrb[0].mxu0 %v965
    %v1042 = vpop.f32.mrb[0].mxu0
    %v1043 = vadd.f32 0.0, %v1042
    %v1044 = vpop.f32.mrb[0].mxu0
    %v1045 = vadd.f32 0.0, %v1044
    %1046 = vmatprep.mubr.f32.mxu0 0.0
    %1047 = vmatmul.mubr.f32.gmra.mrb[0].mxu0 %v968
    %v1048 = vpop.f32.mrb[0].mxu0
    %v1049 = vadd.f32 0.0, %v1048
    %v1050 = vpop.f32.mrb[0].mxu0
    %v1051 = vadd.f32 0.0, %v1050
    %1052 = vmatprep.mubr.f32.mxu0 0.0
    %1053 = vmatmul.mubr.f32.gmra.mrb[0].mxu0 %v971
    %v1054 = vpop.f32.mrb[0].mxu0
    %v1055 = vadd.f32 0.0, %v1054
    %v1056 = vpop.f32.mrb[0].mxu0
    %v1057 = vadd.f32 0.0, %v1056
    %1058 = vmatprep.mubr.f32.mxu0 0.0
    %1059 = vmatmul.mubr.f32.gmra.mrb[0].mxu0 %v974
    %v1060 = vpop.f32.mrb[0].mxu0
    %v1061 = vadd.f32 0.0, %v1060
    %v1062 = vpop.f32.mrb[0].mxu0
    %v1063 = vadd.f32 0.0, %v1062
    %1064 = vdwg.mxu0
    %1065 = vmatprep.subr.mxu0 0.0
    %1066 = vmatpush1.msra.mxu0 %v932
    %1067 = vmatprep.subr.mxu0 0.0
    %1068 = vmatpush1.msra.mxu0 %v933
    %1069 = vmatprep.subr.mxu0 0.0
    %1070 = vmatpush1.msra.mxu0 %v934
    %1071 = vmatprep.subr.mxu0 0.0
    %1072 = vmatpush1.msra.mxu0 %v935
    %1073 = vmatprep.subr.mxu0 0.0
    %1074 = vmatpush1.msra.mxu0 %v936
    %1075 = vmatprep.subr.mxu0 0.0
    %1076 = vmatpush1.msra.mxu0 %v937
    %1077 = vmatprep.subr.mxu0 0.0
    %1078 = vmatpush1.msra.mxu0 %v938
    %1079 = vmatprep.subr.mxu0 0.0
    %1080 = vmatpush1.msra.mxu0 %v939
    %1081 = vmatprep.subr.mxu0 0.0
    %1082 = vmatpush1.msra.mxu0 %v940
    %1083 = vmatprep.subr.mxu0 0.0
    %1084 = vmatpush1.msra.mxu0 %v941
    %1085 = vmatprep.subr.mxu0 0.0
    %1086 = vmatpush1.msra.mxu0 %v942
    %1087 = vmatprep.subr.mxu0 0.0
    %1088 = vmatpush1.msra.mxu0 %v943
    %1089 = vmatprep.subr.mxu0 0.0
    %1090 = vmatpush1.msra.mxu0 %v944
    %1091 = vmatprep.subr.mxu0 0.0
    %1092 = vmatpush1.msra.mxu0 %v945
    %1093 = vmatprep.subr.mxu0 0.0
    %1094 = vmatpush1.msra.mxu0 %v946
    %1095 = vmatprep.subr.mxu0 0.0
    %1096 = vmatpush1.msra.mxu0 %v947
    %1097 = vmatprep.subr.mxu0 0.0
    %1098 = vmatpush1.msra.mxu0 %v948
    %1099 = vmatprep.subr.mxu0 0.0
    %1100 = vmatpush1.msra.mxu0 %v949
    %1101 = vmatprep.subr.mxu0 0.0
    %1102 = vmatpush1.msra.mxu0 %v950
    %1103 = vmatprep.subr.mxu0 0.0
    %1104 = vmatpush1.msra.mxu0 %v951
    %1105 = vmatprep.subr.mxu0 0.0
    %1106 = vmatpush1.msra.mxu0 %v952
    %1107 = vmatprep.subr.mxu0 0.0
    %1108 = vmatpush1.msra.mxu0 %v953
    %1109 = vmatprep.subr.mxu0 0.0
    %1110 = vmatpush1.msra.mxu0 %v954
    %1111 = vmatprep.subr.mxu0 0.0
    %1112 = vmatpush1.msra.mxu0 %v955
    %1113 = vmatprep.subr.mxu0 0.0
    %1114 = vmatpush1.msra.mxu0 %v956
    %1115 = vmatprep.subr.mxu0 0.0
    %1116 = vmatpush1.msra.mxu0 %v957
    %1117 = vmatprep.subr.mxu0 0.0
    %1118 = vmatpush1.msra.mxu0 %v958
    %1119 = vmatprep.subr.mxu0 0.0
    %1120 = vmatpush1.msra.mxu0 %v959
    %1121 = vmatprep.subr.mxu0 0.0
    %1122 = vmatpush1.msra.mxu0 %v960
    %1123 = vmatprep.subr.mxu0 0.0
    %1124 = vmatpush1.msra.mxu0 %v961
    %1125 = vmatprep.subr.mxu0 0.0
    %1126 = vmatpush1.msra.mxu0 %v962
    %1127 = vmatprep.subr.mxu0 0.0
    %1128 = vmatpush1.msra.mxu0 %v963
    %1129 = vmatprep.mubr.f32.mxu0 %v1045
    %1130 = vmatmul.mubr.f32.gmra.mrb[0].mxu0 %v1043
    %v1131 = vpop.f32.mrb[0].mxu0
    %v1132 = vadd.f32 0.0, %v1131
    %v1133 = vpop.f32.mrb[0].mxu0
    %1134 = vmatprep.mubr.f32.mxu0 %v1051
    %1135 = vmatmul.mubr.f32.gmra.mrb[0].mxu0 %v1049
    %v1136 = vpop.f32.mrb[0].mxu0
    %v1137 = vadd.f32 0.0, %v1136
    %v1138 = vpop.f32.mrb[0].mxu0
    %1139 = vmatprep.mubr.f32.mxu0 %v1057
    %1140 = vmatmul.mubr.f32.gmra.mrb[0].mxu0 %v1055
    %v1141 = vpop.f32.mrb[0].mxu0
    %v1142 = vadd.f32 0.0, %v1141
    %v1143 = vpop.f32.mrb[0].mxu0
    %1144 = vmatprep.mubr.f32.mxu0 %v1063
    %1145 = vmatmul.mubr.f32.gmra.mrb[0].mxu0 %v1061
    %v1146 = vpop.f32.mrb[0].mxu0
    %v1147 = vadd.f32 0.0, %v1146
    %v1148 = vpop.f32.mrb[0].mxu0
    %1149 = vdwg.mxu0
    %v1154 = vrot.slane %v1132, 1
    %v1155 = vrot.slane %v1137, 1
    %v1156 = vsel %vm187, %v1154, %v1155
    %v1157 = vrot.slane %v1142, 1
    %v1158 = vsel %vm187, %v1155, %v1157
    %v1159 = vrot.slane %v1147, 1
    %v1160 = vsel %vm187, %v1157, %v1159
    %v1165 = vsel %vm187, %v1159, 0.0
    %v1166 = vrot.slane %v1132, 2
    %v1167 = vrot.slane %v1137, 2
    %v1168 = vsel %vm205, %v1166, %v1167
    %v1169 = vrot.slane %v1142, 2
    %v1170 = vsel %vm205, %v1167, %v1169
    %v1171 = vrot.slane %v1147, 2
    %v1172 = vsel %vm205, %v1169, %v1171
    %v1177 = vsel %vm205, %v1171, 0.0
    %v1178 = vrot.slane %v1132, 3
    %v1179 = vrot.slane %v1137, 3
    %v1180 = vsel %vm223, %v1178, %v1179
    %v1181 = vrot.slane %v1142, 3
    %v1182 = vsel %vm223, %v1179, %v1181
    %v1183 = vrot.slane %v1147, 3
    %v1184 = vsel %vm223, %v1181, %v1183
    %v1189 = vsel %vm223, %v1183, 0.0
    %v1190 = vrot.slane %v1132, 4
    %v1191 = vrot.slane %v1137, 4
    %v1192 = vsel %vm241, %v1190, %v1191
    %v1193 = vrot.slane %v1142, 4
    %v1194 = vsel %vm241, %v1191, %v1193
    %v1195 = vrot.slane %v1147, 4
    %v1196 = vsel %vm241, %v1193, %v1195
    %v1201 = vsel %vm241, %v1195, 0.0
    %v1202 = vld [vmem:[#allocation5 + $0x3c0] sm:$0xff]
    %v1203 = vld [vmem:[#allocation5 + $0x3c8] sm:$0xff]
    %v1204 = vld [vmem:[#allocation5 + $0x3d0] sm:$0xff]
    %v1205 = vld [vmem:[#allocation5 + $0x3d8] sm:$0xff]
    %v1206 = vld [vmem:[#allocation5 + $0x3e0] sm:$0xff]
    %v1207 = vld [vmem:[#allocation5 + $0x3e8] sm:$0xff]
    %v1208 = vld [vmem:[#allocation5 + $0x3f0] sm:$0xff]
    %v1209 = vld [vmem:[#allocation5 + $0x3f8] sm:$0xff]
    %v1210 = vld [vmem:[#allocation5 + $0x400] sm:$0xff]
    %v1211 = vld [vmem:[#allocation5 + $0x408] sm:$0xff]
    %v1212 = vld [vmem:[#allocation5 + $0x410] sm:$0xff]
    %v1213 = vld [vmem:[#allocation5 + $0x418] sm:$0xff]
    %v1214 = vld [vmem:[#allocation5 + $0x420] sm:$0xff]
    %v1215 = vld [vmem:[#allocation5 + $0x428] sm:$0xff]
    %v1216 = vld [vmem:[#allocation5 + $0x430] sm:$0xff]
    %v1217 = vld [vmem:[#allocation5 + $0x438] sm:$0xff]
    %v1218 = vld [vmem:[#allocation5 + $0x440] sm:$0xff]
    %v1219 = vld [vmem:[#allocation5 + $0x448] sm:$0xff]
    %v1220 = vld [vmem:[#allocation5 + $0x450] sm:$0xff]
    %v1221 = vld [vmem:[#allocation5 + $0x458] sm:$0xff]
    %v1222 = vld [vmem:[#allocation5 + $0x460] sm:$0xff]
    %v1223 = vld [vmem:[#allocation5 + $0x468] sm:$0xff]
    %v1224 = vld [vmem:[#allocation5 + $0x470] sm:$0xff]
    %v1225 = vld [vmem:[#allocation5 + $0x478] sm:$0xff]
    %v1226 = vld [vmem:[#allocation5 + $0x480] sm:$0xff]
    %v1227 = vld [vmem:[#allocation5 + $0x488] sm:$0xff]
    %v1228 = vld [vmem:[#allocation5 + $0x490] sm:$0xff]
    %v1229 = vld [vmem:[#allocation5 + $0x498] sm:$0xff]
    %v1230 = vld [vmem:[#allocation5 + $0x4a0] sm:$0xff]
    %v1231 = vld [vmem:[#allocation5 + $0x4a8] sm:$0xff]
    %v1232 = vld [vmem:[#allocation5 + $0x4b0] sm:$0xff]
    %v1233 = vld [vmem:[#allocation5 + $0x4b8] sm:$0xff]
    %v1234 = vld [vmem:[#allocation5 + $0x4c0] sm:$0xff]
    %v1235 = vld [vmem:[#allocation5 + $0x4c8] sm:$0xff]
    %v1236 = vld [vmem:[#allocation5 + $0x4d0] sm:$0xff]
    %v1237 = vld [vmem:[#allocation5 + $0x4d8] sm:$0xff]
    %v1238 = vld [vmem:[#allocation5 + $0x4e0] sm:$0xff]
    %v1239 = vld [vmem:[#allocation5 + $0x4e8] sm:$0xff]
    %v1240 = vld [vmem:[#allocation5 + $0x4f0] sm:$0xff]
    %v1241 = vld [vmem:[#allocation5 + $0x4f8] sm:$0xff]
    %v1242 = vld [vmem:[#allocation5 + $0x500] sm:$0xff]
    %v1243 = vld [vmem:[#allocation5 + $0x508] sm:$0xff]
    %v1244 = vld [vmem:[#allocation5 + $0x510] sm:$0xff]
    %v1245 = vld [vmem:[#allocation5 + $0x518] sm:$0xff]
    %v1246 = vld [vmem:[#allocation5 + $0x520] sm:$0xff]
    %v1247 = vld [vmem:[#allocation5 + $0x528] sm:$0xff]
    %v1248 = vld [vmem:[#allocation5 + $0x530] sm:$0xff]
    %v1249 = vld [vmem:[#allocation5 + $0x538] sm:$0xff]
    %v1250 = vld [vmem:[#allocation5 + $0x540] sm:$0xff]
    %v1251 = vld [vmem:[#allocation5 + $0x548] sm:$0xff]
    %v1252 = vld [vmem:[#allocation5 + $0x550] sm:$0xff]
    %v1253 = vld [vmem:[#allocation5 + $0x558] sm:$0xff]
    %v1254 = vld [vmem:[#allocation5 + $0x560] sm:$0xff]
    %v1255 = vld [vmem:[#allocation5 + $0x568] sm:$0xff]
    %v1256 = vld [vmem:[#allocation5 + $0x570] sm:$0xff]
    %v1257 = vld [vmem:[#allocation5 + $0x578] sm:$0xff]
    %v1258 = vld [vmem:[#allocation5 + $0x580] sm:$0xff]
    %v1259 = vld [vmem:[#allocation5 + $0x588] sm:$0xff]
    %v1260 = vld [vmem:[#allocation5 + $0x590] sm:$0xff]
    %v1261 = vld [vmem:[#allocation5 + $0x598] sm:$0xff]
    %v1262 = vld [vmem:[#allocation5 + $0x5a0] sm:$0xff]
    %v1263 = vld [vmem:[#allocation5 + $0x5a8] sm:$0xff]
    %v1264 = vld [vmem:[#allocation5 + $0x5b0] sm:$0xff]
    %v1265 = vld [vmem:[#allocation5 + $0x5b8] sm:$0xff]
    %v1266 = vld [vmem:[#allocation5 + $0x5c0] sm:$0xff]
    %v1267 = vld [vmem:[#allocation5 + $0x5c8] sm:$0xff]
    %v1268 = vld [vmem:[#allocation5 + $0x5d0] sm:$0xff]
    %v1269 = vld [vmem:[#allocation5 + $0x5d8] sm:$0xff]
    %v1270 = vld [vmem:[#allocation5 + $0x5e0] sm:$0xff]
    %v1271 = vld [vmem:[#allocation5 + $0x5e8] sm:$0xff]
    %v1272 = vld [vmem:[#allocation5 + $0x5f0] sm:$0xff]
    %v1273 = vld [vmem:[#allocation5 + $0x5f8] sm:$0xff]
    %v1274 = vld [vmem:[#allocation5 + $0x600] sm:$0xff]
    %v1275 = vld [vmem:[#allocation5 + $0x608] sm:$0xff]
    %v1276 = vld [vmem:[#allocation5 + $0x610] sm:$0xff]
    %v1277 = vld [vmem:[#allocation5 + $0x618] sm:$0xff]
    %v1278 = vld [vmem:[#allocation5 + $0x620] sm:$0xff]
    %v1279 = vld [vmem:[#allocation5 + $0x628] sm:$0xff]
    %v1280 = vld [vmem:[#allocation5 + $0x630] sm:$0xff]
    %v1281 = vld [vmem:[#allocation5 + $0x638] sm:$0xff]
    %v1282 = vld [vmem:[#allocation5 + $0x640] sm:$0xff]
    %v1283 = vld [vmem:[#allocation5 + $0x648] sm:$0xff]
    %v1284 = vld [vmem:[#allocation5 + $0x650] sm:$0xff]
    %v1285 = vld [vmem:[#allocation5 + $0x658] sm:$0xff]
    %v1286 = vld [vmem:[#allocation5 + $0x660] sm:$0xff]
    %v1287 = vld [vmem:[#allocation5 + $0x668] sm:$0xff]
    %v1288 = vld [vmem:[#allocation5 + $0x670] sm:$0xff]
    %v1289 = vld [vmem:[#allocation5 + $0x678] sm:$0xff]
    %v1290 = vld [vmem:[#allocation5 + $0x680] sm:$0xff]
    %v1291 = vld [vmem:[#allocation5 + $0x688] sm:$0xff]
    %v1292 = vld [vmem:[#allocation5 + $0x690] sm:$0xff]
    %v1293 = vld [vmem:[#allocation5 + $0x698] sm:$0xff]
    %v1294 = vld [vmem:[#allocation5 + $0x6a0] sm:$0xff]
    %v1295 = vld [vmem:[#allocation5 + $0x6a8] sm:$0xff]
    %v1296 = vld [vmem:[#allocation5 + $0x6b0] sm:$0xff]
    %v1297 = vld [vmem:[#allocation5 + $0x6b8] sm:$0xff]
    %v1298 = vld [vmem:[#allocation5 + $0x6c0] sm:$0xff]
    %v1299 = vld [vmem:[#allocation5 + $0x6c8] sm:$0xff]
    %v1300 = vld [vmem:[#allocation5 + $0x6d0] sm:$0xff]
    %v1301 = vld [vmem:[#allocation5 + $0x6d8] sm:$0xff]
    %v1302 = vld [vmem:[#allocation5 + $0x6e0] sm:$0xff]
    %v1303 = vld [vmem:[#allocation5 + $0x6e8] sm:$0xff]
    %v1304 = vld [vmem:[#allocation5 + $0x6f0] sm:$0xff]
    %v1305 = vld [vmem:[#allocation5 + $0x6f8] sm:$0xff]
    %v1306 = vld [vmem:[#allocation5 + $0x700] sm:$0xff]
    %v1307 = vld [vmem:[#allocation5 + $0x708] sm:$0xff]
    %v1308 = vld [vmem:[#allocation5 + $0x710] sm:$0xff]
    %v1309 = vld [vmem:[#allocation5 + $0x718] sm:$0xff]
    %v1310 = vld [vmem:[#allocation5 + $0x720] sm:$0xff]
    %v1311 = vld [vmem:[#allocation5 + $0x728] sm:$0xff]
    %v1312 = vld [vmem:[#allocation5 + $0x730] sm:$0xff]
    %v1313 = vld [vmem:[#allocation5 + $0x738] sm:$0xff]
    %v1314 = vld [vmem:[#allocation5 + $0x740] sm:$0xff]
    %v1315 = vld [vmem:[#allocation5 + $0x748] sm:$0xff]
    %v1316 = vld [vmem:[#allocation5 + $0x750] sm:$0xff]
    %v1317 = vld [vmem:[#allocation5 + $0x758] sm:$0xff]
    %v1318 = vld [vmem:[#allocation5 + $0x760] sm:$0xff]
    %v1319 = vld [vmem:[#allocation5 + $0x768] sm:$0xff]
    %v1320 = vld [vmem:[#allocation5 + $0x770] sm:$0xff]
    %v1321 = vld [vmem:[#allocation5 + $0x778] sm:$0xff]
    %v1322 = vld [vmem:[#allocation5 + $0x780] sm:$0xff]
    %v1323 = vld [vmem:[#allocation5 + $0x788] sm:$0xff]
    %v1324 = vld [vmem:[#allocation5 + $0x790] sm:$0xff]
    %v1325 = vld [vmem:[#allocation5 + $0x798] sm:$0xff]
    %v1326 = vld [vmem:[#allocation5 + $0x7a0] sm:$0xff]
    %v1327 = vld [vmem:[#allocation5 + $0x7a8] sm:$0xff]
    %v1328 = vld [vmem:[#allocation5 + $0x7b0] sm:$0xff]
    %v1329 = vld [vmem:[#allocation5 + $0x7b8] sm:$0xff]
    %v1330 = vld [vmem:[#allocation5 + $0x7c0] sm:$0xff]
    %v1331 = vld [vmem:[#allocation5 + $0x7c8] sm:$0xff]
    %v1332 = vld [vmem:[#allocation5 + $0x7d0] sm:$0xff]
    %v1333 = vld [vmem:[#allocation5 + $0x7d8] sm:$0xff]
    %v1334 = vld [vmem:[#allocation5 + $0x7e0] sm:$0xff]
    %v1335 = vld [vmem:[#allocation5 + $0x7e8] sm:$0xff]
    %v1336 = vld [vmem:[#allocation5 + $0x7f0] sm:$0xff]
    %v1337 = vld [vmem:[#allocation5 + $0x7f8] sm:$0xff]
    %v1338 = vld [vmem:[#allocation5 + $0x800] sm:$0xff]
    %v1339 = vld [vmem:[#allocation5 + $0x808] sm:$0xff]
    %v1340 = vld [vmem:[#allocation5 + $0x810] sm:$0xff]
    %v1341 = vld [vmem:[#allocation5 + $0x818] sm:$0xff]
    %v1342 = vld [vmem:[#allocation5 + $0x820] sm:$0xff]
    %v1343 = vld [vmem:[#allocation5 + $0x828] sm:$0xff]
    %v1344 = vld [vmem:[#allocation5 + $0x830] sm:$0xff]
    %v1345 = vld [vmem:[#allocation5 + $0x838] sm:$0xff]
    %v1346 = vld [vmem:[#allocation5 + $0x840] sm:$0xff]
    %v1347 = vld [vmem:[#allocation5 + $0x848] sm:$0xff]
    %v1348 = vld [vmem:[#allocation5 + $0x850] sm:$0xff]
    %v1349 = vld [vmem:[#allocation5 + $0x858] sm:$0xff]
    %v1350 = vld [vmem:[#allocation5 + $0x860] sm:$0xff]
    %v1351 = vld [vmem:[#allocation5 + $0x868] sm:$0xff]
    %v1352 = vld [vmem:[#allocation5 + $0x870] sm:$0xff]
    %v1353 = vld [vmem:[#allocation5 + $0x878] sm:$0xff]
    %v1354 = vld [vmem:[#allocation5 + $0x880] sm:$0xff]
    %v1355 = vld [vmem:[#allocation5 + $0x888] sm:$0xff]
    %v1356 = vld [vmem:[#allocation5 + $0x890] sm:$0xff]
    %v1357 = vld [vmem:[#allocation5 + $0x898] sm:$0xff]
    %v1358 = vld [vmem:[#allocation5 + $0x8a0] sm:$0xff]
    %v1359 = vld [vmem:[#allocation5 + $0x8a8] sm:$0xff]
    %v1360 = vld [vmem:[#allocation5 + $0x8b0] sm:$0xff]
    %v1361 = vld [vmem:[#allocation5 + $0x8b8] sm:$0xff]
    %s1362 = scalar_lea.vmem [#allocation5], 2256
    %v1363 = vld [vmem:[%s1362] ss:$8 sm:$0x3]
    %v1365 = vlaneseq
    %v1366 = vshrl.u32 %v1365, 7
    %v1367 = vsub.s32 0, %v1366
    %v1368 = vrot.slane %v1363, %v1367
    %v1369 = vlaneseq
    %v1370 = vshrl.u32 %v1369, 7
    %v1371 = vsub.s32 1, %v1370
    %v1372 = vrot.slane %v1363, %v1371
    %1375 = vmatprep.subr.mxu0 %v1203
    %1376 = vmatpush1.msra.mxu0 %v1202
    %1377 = vmatprep.subr.mxu0 %v1205
    %1378 = vmatpush1.msra.mxu0 %v1204
    %1379 = vmatprep.subr.mxu0 %v1207
    %1380 = vmatpush1.msra.mxu0 %v1206
    %1381 = vmatprep.subr.mxu0 %v1209
    %1382 = vmatpush1.msra.mxu0 %v1208
    %1383 = vmatprep.subr.mxu0 %v1211
    %1384 = vmatpush1.msra.mxu0 %v1210
    %1385 = vmatprep.subr.mxu0 %v1213
    %1386 = vmatpush1.msra.mxu0 %v1212
    %1387 = vmatprep.subr.mxu0 %v1215
    %1388 = vmatpush1.msra.mxu0 %v1214
    %1389 = vmatprep.subr.mxu0 %v1217
    %1390 = vmatpush1.msra.mxu0 %v1216
    %1391 = vmatprep.subr.mxu0 %v1219
    %1392 = vmatpush1.msra.mxu0 %v1218
    %1393 = vmatprep.subr.mxu0 %v1221
    %1394 = vmatpush1.msra.mxu0 %v1220
    %1395 = vmatprep.subr.mxu0 %v1223
    %1396 = vmatpush1.msra.mxu0 %v1222
    %1397 = vmatprep.subr.mxu0 %v1225
    %1398 = vmatpush1.msra.mxu0 %v1224
    %1399 = vmatprep.subr.mxu0 %v1227
    %1400 = vmatpush1.msra.mxu0 %v1226
    %1401 = vmatprep.subr.mxu0 %v1229
    %1402 = vmatpush1.msra.mxu0 %v1228
    %1403 = vmatprep.subr.mxu0 %v1231
    %1404 = vmatpush1.msra.mxu0 %v1230
    %1405 = vmatprep.subr.mxu0 %v1233
    %1406 = vmatpush1.msra.mxu0 %v1232
    %1407 = vmatprep.subr.mxu0 %v1235
    %1408 = vmatpush1.msra.mxu0 %v1234
    %1409 = vmatprep.subr.mxu0 %v1237
    %1410 = vmatpush1.msra.mxu0 %v1236
    %1411 = vmatprep.subr.mxu0 %v1239
    %1412 = vmatpush1.msra.mxu0 %v1238
    %1413 = vmatprep.subr.mxu0 %v1241
    %1414 = vmatpush1.msra.mxu0 %v1240
    %1415 = vmatprep.subr.mxu0 %v1243
    %1416 = vmatpush1.msra.mxu0 %v1242
    %1417 = vmatprep.subr.mxu0 %v1245
    %1418 = vmatpush1.msra.mxu0 %v1244
    %1419 = vmatprep.subr.mxu0 %v1247
    %1420 = vmatpush1.msra.mxu0 %v1246
    %1421 = vmatprep.subr.mxu0 %v1249
    %1422 = vmatpush1.msra.mxu0 %v1248
    %1423 = vmatprep.subr.mxu0 %v1251
    %1424 = vmatpush1.msra.mxu0 %v1250
    %1425 = vmatprep.subr.mxu0 %v1253
    %1426 = vmatpush1.msra.mxu0 %v1252
    %1427 = vmatprep.subr.mxu0 %v1255
    %1428 = vmatpush1.msra.mxu0 %v1254
    %1429 = vmatprep.subr.mxu0 %v1257
    %1430 = vmatpush1.msra.mxu0 %v1256
    %1431 = vmatprep.subr.mxu0 %v1259
    %1432 = vmatpush1.msra.mxu0 %v1258
    %1433 = vmatprep.subr.mxu0 %v1261
    %1434 = vmatpush1.msra.mxu0 %v1260
    %1435 = vmatprep.subr.mxu0 %v1263
    %1436 = vmatpush1.msra.mxu0 %v1262
    %1437 = vmatprep.subr.mxu0 %v1265
    %1438 = vmatpush1.msra.mxu0 %v1264
    %1439 = vmatprep.mubr.f32.mxu0 %v1156
    %1440 = vmatmul.mubr.f32.gmra.mrb[0].mxu0 %v1132
    %v1441 = vpop.f32.mrb[0].mxu0
    %v1442 = vadd.f32 %v1368, %v1441
    %v1443 = vpop.f32.mrb[0].mxu0
    %v1444 = vadd.f32 %v1372, %v1443
    %1445 = vmatprep.mubr.f32.mxu0 %v1158
    %1446 = vmatmul.mubr.f32.gmra.mrb[0].mxu0 %v1137
    %v1447 = vpop.f32.mrb[0].mxu0
    %v1448 = vadd.f32 %v1368, %v1447
    %v1449 = vpop.f32.mrb[0].mxu0
    %v1450 = vadd.f32 %v1372, %v1449
    %1451 = vmatprep.mubr.f32.mxu0 %v1160
    %1452 = vmatmul.mubr.f32.gmra.mrb[0].mxu0 %v1142
    %v1453 = vpop.f32.mrb[0].mxu0
    %v1454 = vadd.f32 %v1368, %v1453
    %v1455 = vpop.f32.mrb[0].mxu0
    %v1456 = vadd.f32 %v1372, %v1455
    %1457 = vmatprep.mubr.f32.mxu0 %v1165
    %1458 = vmatmul.mubr.f32.gmra.mrb[0].mxu0 %v1147
    %v1459 = vpop.f32.mrb[0].mxu0
    %v1460 = vadd.f32 %v1368, %v1459
    %v1461 = vpop.f32.mrb[0].mxu0
    %v1462 = vadd.f32 %v1372, %v1461
    %1463 = vdwg.mxu0
    %1464 = vmatprep.subr.mxu0 %v1267
    %1465 = vmatpush1.msra.mxu0 %v1266
    %1466 = vmatprep.subr.mxu0 %v1269
    %1467 = vmatpush1.msra.mxu0 %v1268
    %1468 = vmatprep.subr.mxu0 %v1271
    %1469 = vmatpush1.msra.mxu0 %v1270
    %1470 = vmatprep.subr.mxu0 %v1273
    %1471 = vmatpush1.msra.mxu0 %v1272
    %1472 = vmatprep.subr.mxu0 %v1275
    %1473 = vmatpush1.msra.mxu0 %v1274
    %1474 = vmatprep.subr.mxu0 %v1277
    %1475 = vmatpush1.msra.mxu0 %v1276
    %1476 = vmatprep.subr.mxu0 %v1279
    %1477 = vmatpush1.msra.mxu0 %v1278
    %1478 = vmatprep.subr.mxu0 %v1281
    %1479 = vmatpush1.msra.mxu0 %v1280
    %1480 = vmatprep.subr.mxu0 %v1283
    %1481 = vmatpush1.msra.mxu0 %v1282
    %1482 = vmatprep.subr.mxu0 %v1285
    %1483 = vmatpush1.msra.mxu0 %v1284
    %1484 = vmatprep.subr.mxu0 %v1287
    %1485 = vmatpush1.msra.mxu0 %v1286
    %1486 = vmatprep.subr.mxu0 %v1289
    %1487 = vmatpush1.msra.mxu0 %v1288
    %1488 = vmatprep.subr.mxu0 %v1291
    %1489 = vmatpush1.msra.mxu0 %v1290
    %1490 = vmatprep.subr.mxu0 %v1293
    %1491 = vmatpush1.msra.mxu0 %v1292
    %1492 = vmatprep.subr.mxu0 %v1295
    %1493 = vmatpush1.msra.mxu0 %v1294
    %1494 = vmatprep.subr.mxu0 %v1297
    %1495 = vmatpush1.msra.mxu0 %v1296
    %1496 = vmatprep.subr.mxu0 %v1299
    %1497 = vmatpush1.msra.mxu0 %v1298
    %1498 = vmatprep.subr.mxu0 %v1301
    %1499 = vmatpush1.msra.mxu0 %v1300
    %1500 = vmatprep.subr.mxu0 %v1303
    %1501 = vmatpush1.msra.mxu0 %v1302
    %1502 = vmatprep.subr.mxu0 %v1305
    %1503 = vmatpush1.msra.mxu0 %v1304
    %1504 = vmatprep.subr.mxu0 %v1307
    %1505 = vmatpush1.msra.mxu0 %v1306
    %1506 = vmatprep.subr.mxu0 %v1309
    %1507 = vmatpush1.msra.mxu0 %v1308
    %1508 = vmatprep.subr.mxu0 %v1311
    %1509 = vmatpush1.msra.mxu0 %v1310
    %1510 = vmatprep.subr.mxu0 %v1313
    %1511 = vmatpush1.msra.mxu0 %v1312
    %1512 = vmatprep.subr.mxu0 %v1315
    %1513 = vmatpush1.msra.mxu0 %v1314
    %1514 = vmatprep.subr.mxu0 %v1317
    %1515 = vmatpush1.msra.mxu0 %v1316
    %1516 = vmatprep.subr.mxu0 %v1319
    %1517 = vmatpush1.msra.mxu0 %v1318
    %1518 = vmatprep.subr.mxu0 %v1321
    %1519 = vmatpush1.msra.mxu0 %v1320
    %1520 = vmatprep.subr.mxu0 %v1323
    %1521 = vmatpush1.msra.mxu0 %v1322
    %1522 = vmatprep.subr.mxu0 %v1325
    %1523 = vmatpush1.msra.mxu0 %v1324
    %1524 = vmatprep.subr.mxu0 %v1327
    %1525 = vmatpush1.msra.mxu0 %v1326
    %1526 = vmatprep.subr.mxu0 %v1329
    %1527 = vmatpush1.msra.mxu0 %v1328
    %1528 = vmatprep.mubr.f32.mxu0 %v1180
    %1529 = vmatmul.mubr.f32.gmra.mrb[0].mxu0 %v1168
    %v1530 = vpop.f32.mrb[0].mxu0
    %v1531 = vadd.f32 %v1442, %v1530
    %v1532 = vpop.f32.mrb[0].mxu0
    %v1533 = vadd.f32 %v1444, %v1532
    %1534 = vmatprep.mubr.f32.mxu0 %v1182
    %1535 = vmatmul.mubr.f32.gmra.mrb[0].mxu0 %v1170
    %v1536 = vpop.f32.mrb[0].mxu0
    %v1537 = vadd.f32 %v1448, %v1536
    %v1538 = vpop.f32.mrb[0].mxu0
    %v1539 = vadd.f32 %v1450, %v1538
    %1540 = vmatprep.mubr.f32.mxu0 %v1184
    %1541 = vmatmul.mubr.f32.gmra.mrb[0].mxu0 %v1172
    %v1542 = vpop.f32.mrb[0].mxu0
    %v1543 = vadd.f32 %v1454, %v1542
    %v1544 = vpop.f32.mrb[0].mxu0
    %v1545 = vadd.f32 %v1456, %v1544
    %1546 = vmatprep.mubr.f32.mxu0 %v1189
    %1547 = vmatmul.mubr.f32.gmra.mrb[0].mxu0 %v1177
    %v1548 = vpop.f32.mrb[0].mxu0
    %v1549 = vadd.f32 %v1460, %v1548
    %v1550 = vpop.f32.mrb[0].mxu0
    %v1551 = vadd.f32 %v1462, %v1550
    %1552 = vdwg.mxu0
    %1553 = vmatprep.subr.mxu0 %v1331
    %1554 = vmatpush1.msra.mxu0 %v1330
    %1555 = vmatprep.subr.mxu0 %v1333
    %1556 = vmatpush1.msra.mxu0 %v1332
    %1557 = vmatprep.subr.mxu0 %v1335
    %1558 = vmatpush1.msra.mxu0 %v1334
    %1559 = vmatprep.subr.mxu0 %v1337
    %1560 = vmatpush1.msra.mxu0 %v1336
    %1561 = vmatprep.subr.mxu0 %v1339
    %1562 = vmatpush1.msra.mxu0 %v1338
    %1563 = vmatprep.subr.mxu0 %v1341
    %1564 = vmatpush1.msra.mxu0 %v1340
    %1565 = vmatprep.subr.mxu0 %v1343
    %1566 = vmatpush1.msra.mxu0 %v1342
    %1567 = vmatprep.subr.mxu0 %v1345
    %1568 = vmatpush1.msra.mxu0 %v1344
    %1569 = vmatprep.subr.mxu0 %v1347
    %1570 = vmatpush1.msra.mxu0 %v1346
    %1571 = vmatprep.subr.mxu0 %v1349
    %1572 = vmatpush1.msra.mxu0 %v1348
    %1573 = vmatprep.subr.mxu0 %v1351
    %1574 = vmatpush1.msra.mxu0 %v1350
    %1575 = vmatprep.subr.mxu0 %v1353
    %1576 = vmatpush1.msra.mxu0 %v1352
    %1577 = vmatprep.subr.mxu0 %v1355
    %1578 = vmatpush1.msra.mxu0 %v1354
    %1579 = vmatprep.subr.mxu0 %v1357
    %1580 = vmatpush1.msra.mxu0 %v1356
    %1581 = vmatprep.subr.mxu0 %v1359
    %1582 = vmatpush1.msra.mxu0 %v1358
    %1583 = vmatprep.subr.mxu0 %v1361
    %1584 = vmatpush1.msra.mxu0 %v1360
    %1585 = vmatprep.subr.mxu0 0.0
    %1586 = vmatpush1.msra.mxu0 0.0
    %1587 = vmatprep.subr.mxu0 0.0
    %1588 = vmatpush1.msra.mxu0 0.0
    %1589 = vmatprep.subr.mxu0 0.0
    %1590 = vmatpush1.msra.mxu0 0.0
    %1591 = vmatprep.subr.mxu0 0.0
    %1592 = vmatpush1.msra.mxu0 0.0
    %1593 = vmatprep.subr.mxu0 0.0
    %1594 = vmatpush1.msra.mxu0 0.0
    %1595 = vmatprep.subr.mxu0 0.0
    %1596 = vmatpush1.msra.mxu0 0.0
    %1597 = vmatprep.subr.mxu0 0.0
    %1598 = vmatpush1.msra.mxu0 0.0
    %1599 = vmatprep.subr.mxu0 0.0
    %1600 = vmatpush1.msra.mxu0 0.0
    %1601 = vmatprep.subr.mxu0 0.0
    %1602 = vmatpush1.msra.mxu0 0.0
    %1603 = vmatprep.subr.mxu0 0.0
    %1604 = vmatpush1.msra.mxu0 0.0
    %1605 = vmatprep.subr.mxu0 0.0
    %1606 = vmatpush1.msra.mxu0 0.0
    %1607 = vmatprep.subr.mxu0 0.0
    %1608 = vmatpush1.msra.mxu0 0.0
    %1609 = vmatprep.subr.mxu0 0.0
    %1610 = vmatpush1.msra.mxu0 0.0
    %1611 = vmatprep.subr.mxu0 0.0
    %1612 = vmatpush1.msra.mxu0 0.0
    %1613 = vmatprep.subr.mxu0 0.0
    %1614 = vmatpush1.msra.mxu0 0.0
    %1615 = vmatprep.subr.mxu0 0.0
    %1616 = vmatpush1.msra.mxu0 0.0
    %1617 = vmatprep.mubr.f32.mxu0 0.0
    %1618 = vmatmul.mubr.f32.gmra.mrb[0].mxu0 %v1192
    %v1619 = vpop.f32.mrb[0].mxu0
    %v1620 = vadd.f32 %v1531, %v1619
    %v1621 = vpop.f32.mrb[0].mxu0
    %v1622 = vadd.f32 %v1533, %v1621
    %1623 = vmatprep.mubr.f32.mxu0 0.0
    %1624 = vmatmul.mubr.f32.gmra.mrb[0].mxu0 %v1194
    %v1625 = vpop.f32.mrb[0].mxu0
    %v1626 = vadd.f32 %v1537, %v1625
    %v1627 = vpop.f32.mrb[0].mxu0
    %v1628 = vadd.f32 %v1539, %v1627
    %1629 = vmatprep.mubr.f32.mxu0 0.0
    %1630 = vmatmul.mubr.f32.gmra.mrb[0].mxu0 %v1196
    %v1631 = vpop.f32.mrb[0].mxu0
    %v1632 = vadd.f32 %v1543, %v1631
    %v1633 = vpop.f32.mrb[0].mxu0
    %v1634 = vadd.f32 %v1545, %v1633
    %1635 = vmatprep.mubr.f32.mxu0 0.0
    %1636 = vmatmul.mubr.f32.gmra.mrb[0].mxu0 %v1201
    %v1637 = vpop.f32.mrb[0].mxu0
    %v1638 = vadd.f32 %v1549, %v1637
    %v1639 = vpop.f32.mrb[0].mxu0
    %v1640 = vadd.f32 %v1551, %v1639
    %1641 = vdwg.mxu0
    %v1642 = vmax.f32 %v1620, 0.0
    %v1643 = vmax.f32 %v1622, 0.0
    %v1644 = vmax.f32 %v1626, 0.0
    %v1645 = vmax.f32 %v1628, 0.0
    %v1646 = vmax.f32 %v1632, 0.0
    %v1647 = vmax.f32 %v1634, 0.0
    %v1648 = vmax.f32 %v1638, 0.0
    %v1649 = vmax.f32 %v1640, 0.0
    %v1658 = vrot.slane %v1642, 1
    %v1659 = vrot.slane %v1644, 1
    %v1660 = vsel %vm187, %v1658, %v1659
    %v1661 = vrot.slane %v1643, 1
    %v1662 = vrot.slane %v1645, 1
    %v1663 = vsel %vm187, %v1661, %v1662
    %v1664 = vrot.slane %v1646, 1
    %v1665 = vsel %vm187, %v1659, %v1664
    %v1666 = vrot.slane %v1647, 1
    %v1667 = vsel %vm187, %v1662, %v1666
    %v1668 = vrot.slane %v1648, 1
    %v1669 = vsel %vm187, %v1664, %v1668
    %v1670 = vrot.slane %v1649, 1
    %v1671 = vsel %vm187, %v1666, %v1670
    %v1680 = vsel %vm187, %v1668, 0.0
    %v1681 = vsel %vm187, %v1670, 0.0
    %v1682 = vmax.f32 %v1642, %v1660
    %v1683 = vmax.f32 %v1643, %v1663
    %v1684 = vmax.f32 %v1644, %v1665
    %v1685 = vmax.f32 %v1645, %v1667
    %v1686 = vmax.f32 %v1646, %v1669
    %v1687 = vmax.f32 %v1647, %v1671
    %v1688 = vmax.f32 %v1648, %v1680
    %v1689 = vmax.f32 %v1649, %v1681
    %1698 = vrot.lane.b32.xlu0 %v1682, 112
    %v1699 = vpop.permute.xlu0 %1698
    %1700 = vrot.lane.b32.xlu0 %v1683, 112
    %v1701 = vpop.permute.xlu0 %1700
    %1702 = vrot.lane.b32.xlu0 %v1684, 112
    %v1703 = vpop.permute.xlu0 %1702
    %1704 = vrot.lane.b32.xlu0 %v1685, 112
    %v1705 = vpop.permute.xlu0 %1704
    %1706 = vrot.lane.b32.xlu0 %v1686, 112
    %v1707 = vpop.permute.xlu0 %1706
    %1708 = vrot.lane.b32.xlu0 %v1687, 112
    %v1709 = vpop.permute.xlu0 %1708
    %1710 = vrot.lane.b32.xlu0 %v1688, 112
    %v1711 = vpop.permute.xlu0 %1710
    %1712 = vrot.lane.b32.xlu0 %v1689, 112
    %v1713 = vpop.permute.xlu0 %1712
    %vm1714 = vcmask 916480
    %v1715 = vsel %vm1714, %v1699, %v1701
    %v1716 = vsel %vm1714, %v1703, %v1705
    %v1717 = vsel %vm1714, %v1707, %v1709
    %v1718 = vsel %vm1714, %v1711, %v1713
    %v1727 = vsel %vm1714, %v1701, 0.0
    %v1728 = vsel %vm1714, %v1705, 0.0
    %v1729 = vsel %vm1714, %v1709, 0.0
    %v1730 = vsel %vm1714, %v1713, 0.0
    %v1731 = vmax.f32 %v1682, %v1715
    %v1732 = vmax.f32 %v1683, %v1727
    %v1733 = vmax.f32 %v1684, %v1716
    %v1734 = vmax.f32 %v1685, %v1728
    %v1735 = vmax.f32 %v1686, %v1717
    %v1736 = vmax.f32 %v1687, %v1729
    %v1737 = vmax.f32 %v1688, %v1718
    %v1738 = vmax.f32 %v1689, %v1730
    %v1739 = vld [vmem:[#allocation7 + $0x220] sm:$0xff]
    %v1740 = vld [vmem:[#allocation7 + $0x228] sm:$0x3]
    %v1741 = vld [vmem:[#allocation7 + $0x100] sm:$0xff]
    %v1742 = vld [vmem:[#allocation7 + $0x108] sm:$0xff]
    %v1743 = vld [vmem:[#allocation7 + $0x110] sm:$0xff]
    %v1744 = vld [vmem:[#allocation7 + $0x118] sm:$0xff]
    %v1745 = vld [vmem:[#allocation7 + $0x120] sm:$0xff]
    %v1746 = vld [vmem:[#allocation7 + $0x128] sm:$0xff]
    %v1747 = vld [vmem:[#allocation7 + $0x130] sm:$0xff]
    %v1748 = vld [vmem:[#allocation7 + $0x138] sm:$0xff]
    %v1749 = vld [vmem:[#allocation7 + $0x140] sm:$0xff]
    %v1750 = vld [vmem:[#allocation7 + $0x148] sm:$0xff]
    %v1751 = vld [vmem:[#allocation7 + $0x150] sm:$0xff]
    %v1752 = vld [vmem:[#allocation7 + $0x158] sm:$0xff]
    %v1753 = vld [vmem:[#allocation7 + $0x160] sm:$0xff]
    %v1754 = vld [vmem:[#allocation7 + $0x168] sm:$0xff]
    %v1755 = vld [vmem:[#allocation7 + $0x170] sm:$0xff]
    %v1756 = vld [vmem:[#allocation7 + $0x178] sm:$0xff]
    %v1757 = vld [vmem:[#allocation7 + $0x180] sm:$0xff]
    %v1758 = vld [vmem:[#allocation7 + $0x188] sm:$0xff]
    %v1759 = vld [vmem:[#allocation7 + $0x190] sm:$0xff]
    %v1760 = vld [vmem:[#allocation7 + $0x198] sm:$0xff]
    %v1761 = vld [vmem:[#allocation7 + $0x1a0] sm:$0xff]
    %v1762 = vld [vmem:[#allocation7 + $0x1a8] sm:$0xff]
    %v1763 = vld [vmem:[#allocation7 + $0x1b0] sm:$0xff]
    %v1764 = vld [vmem:[#allocation7 + $0x1b8] sm:$0xff]
    %v1765 = vld [vmem:[#allocation7 + $0x1c0] sm:$0xff]
    %v1766 = vld [vmem:[#allocation7 + $0x1c8] sm:$0xff]
    %v1767 = vld [vmem:[#allocation7 + $0x1d0] sm:$0xff]
    %v1768 = vld [vmem:[#allocation7 + $0x1d8] sm:$0xff]
    %v1769 = vld [vmem:[#allocation7 + $0x1e0] sm:$0xff]
    %v1770 = vld [vmem:[#allocation7 + $0x1e8] sm:$0xff]
    %v1771 = vld [vmem:[#allocation7 + $0x1f0] sm:$0xff]
    %v1772 = vld [vmem:[#allocation7 + $0x1f8] sm:$0xff]
    %v1774 = vsel %vm117, %v1739, 0
    %v1777 = vsel %vm117, %v1740, 0
    %1779 = vmatprep.subr.mxu0 %v1732
    %1780 = vmatpush1.msra.mxu0 %v1731
    %1781 = vmatprep.subr.mxu0 %v1734
    %1782 = vmatpush1.msra.mxu0 %v1733
    %1783 = vmatprep.subr.mxu0 %v1736
    %1784 = vmatpush1.msra.mxu0 %v1735
    %1785 = vmatprep.subr.mxu0 %v1738
    %1786 = vmatpush1.msra.mxu0 %v1737
    %1787 = vmatprep.subr.mxu0 0.0
    %1788 = vmatpush1.msra.mxu0 0.0
    %1789 = vmatprep.subr.mxu0 0.0
    %1790 = vmatpush1.msra.mxu0 0.0
    %1791 = vmatprep.subr.mxu0 0.0
    %1792 = vmatpush1.msra.mxu0 0.0
    %1793 = vmatprep.subr.mxu0 0.0
    %1794 = vmatpush1.msra.mxu0 0.0
    %1795 = vmatprep.subr.mxu0 0.0
    %1796 = vmatpush1.msra.mxu0 0.0
    %1797 = vmatprep.subr.mxu0 0.0
    %1798 = vmatpush1.msra.mxu0 0.0
    %1799 = vmatprep.subr.mxu0 0.0
    %1800 = vmatpush1.msra.mxu0 0.0
    %1801 = vmatprep.subr.mxu0 0.0
    %1802 = vmatpush1.msra.mxu0 0.0
    %1803 = vmatprep.subr.mxu0 0.0
    %1804 = vmatpush1.msra.mxu0 0.0
    %1805 = vmatprep.subr.mxu0 0.0
    %1806 = vmatpush1.msra.mxu0 0.0
    %1807 = vmatprep.subr.mxu0 0.0
    %1808 = vmatpush1.msra.mxu0 0.0
    %1809 = vmatprep.subr.mxu0 0.0
    %1810 = vmatpush1.msra.mxu0 0.0
    %1811 = vmatprep.subr.mxu0 0.0
    %1812 = vmatpush1.msra.mxu0 0.0
    %1813 = vmatprep.subr.mxu0 0.0
    %1814 = vmatpush1.msra.mxu0 0.0
    %1815 = vmatprep.subr.mxu0 0.0
    %1816 = vmatpush1.msra.mxu0 0.0
    %1817 = vmatprep.subr.mxu0 0.0
    %1818 = vmatpush1.msra.mxu0 0.0
    %1819 = vmatprep.subr.mxu0 0.0
    %1820 = vmatpush1.msra.mxu0 0.0
    %1821 = vmatprep.subr.mxu0 0.0
    %1822 = vmatpush1.msra.mxu0 0.0
    %1823 = vmatprep.subr.mxu0 0.0
    %1824 = vmatpush1.msra.mxu0 0.0
    %1825 = vmatprep.subr.mxu0 0.0
    %1826 = vmatpush1.msra.mxu0 0.0
    %1827 = vmatprep.subr.mxu0 0.0
    %1828 = vmatpush1.msra.mxu0 0.0
    %1829 = vmatprep.subr.mxu0 0.0
    %1830 = vmatpush1.msra.mxu0 0.0
    %1831 = vmatprep.subr.mxu0 0.0
    %1832 = vmatpush1.msra.mxu0 0.0
    %1833 = vmatprep.subr.mxu0 0.0
    %1834 = vmatpush1.msra.mxu0 0.0
    %1835 = vmatprep.subr.mxu0 0.0
    %1836 = vmatpush1.msra.mxu0 0.0
    %1837 = vmatprep.subr.mxu0 0.0
    %1838 = vmatpush1.msra.mxu0 0.0
    %1839 = vmatprep.subr.mxu0 0.0
    %1840 = vmatpush1.msra.mxu0 0.0
    %1841 = vmatprep.subr.mxu0 0.0
    %1842 = vmatpush1.msra.mxu0 0.0
    %1843 = vmatprep.mubr.f32.mxu0 0.0
    %1844 = vmatmul.mubr.f32.gmra.mrb[0].mxu0 %v1774
    %v1845 = vpop.f32.mrb[0].mxu0
    %v1846 = vadd.f32 0.0, %v1845
    %v1847 = vpop.f32.mrb[0].mxu0
    %v1848 = vadd.f32 0.0, %v1847
    %1849 = vmatprep.mubr.f32.mxu0 0.0
    %1850 = vmatmul.mubr.f32.gmra.mrb[0].mxu0 %v1777
    %v1851 = vpop.f32.mrb[0].mxu0
    %v1852 = vadd.f32 0.0, %v1851
    %v1853 = vpop.f32.mrb[0].mxu0
    %v1854 = vadd.f32 0.0, %v1853
    %1855 = vdwg.mxu0
    %1856 = vmatprep.subr.mxu0 0.0
    %1857 = vmatpush1.msra.mxu0 %v1741
    %1858 = vmatprep.subr.mxu0 0.0
    %1859 = vmatpush1.msra.mxu0 %v1742
    %1860 = vmatprep.subr.mxu0 0.0
    %1861 = vmatpush1.msra.mxu0 %v1743
    %1862 = vmatprep.subr.mxu0 0.0
    %1863 = vmatpush1.msra.mxu0 %v1744
    %1864 = vmatprep.subr.mxu0 0.0
    %1865 = vmatpush1.msra.mxu0 %v1745
    %1866 = vmatprep.subr.mxu0 0.0
    %1867 = vmatpush1.msra.mxu0 %v1746
    %1868 = vmatprep.subr.mxu0 0.0
    %1869 = vmatpush1.msra.mxu0 %v1747
    %1870 = vmatprep.subr.mxu0 0.0
    %1871 = vmatpush1.msra.mxu0 %v1748
    %1872 = vmatprep.subr.mxu0 0.0
    %1873 = vmatpush1.msra.mxu0 %v1749
    %1874 = vmatprep.subr.mxu0 0.0
    %1875 = vmatpush1.msra.mxu0 %v1750
    %1876 = vmatprep.subr.mxu0 0.0
    %1877 = vmatpush1.msra.mxu0 %v1751
    %1878 = vmatprep.subr.mxu0 0.0
    %1879 = vmatpush1.msra.mxu0 %v1752
    %1880 = vmatprep.subr.mxu0 0.0
    %1881 = vmatpush1.msra.mxu0 %v1753
    %1882 = vmatprep.subr.mxu0 0.0
    %1883 = vmatpush1.msra.mxu0 %v1754
    %1884 = vmatprep.subr.mxu0 0.0
    %1885 = vmatpush1.msra.mxu0 %v1755
    %1886 = vmatprep.subr.mxu0 0.0
    %1887 = vmatpush1.msra.mxu0 %v1756
    %1888 = vmatprep.subr.mxu0 0.0
    %1889 = vmatpush1.msra.mxu0 %v1757
    %1890 = vmatprep.subr.mxu0 0.0
    %1891 = vmatpush1.msra.mxu0 %v1758
    %1892 = vmatprep.subr.mxu0 0.0
    %1893 = vmatpush1.msra.mxu0 %v1759
    %1894 = vmatprep.subr.mxu0 0.0
    %1895 = vmatpush1.msra.mxu0 %v1760
    %1896 = vmatprep.subr.mxu0 0.0
    %1897 = vmatpush1.msra.mxu0 %v1761
    %1898 = vmatprep.subr.mxu0 0.0
    %1899 = vmatpush1.msra.mxu0 %v1762
    %1900 = vmatprep.subr.mxu0 0.0
    %1901 = vmatpush1.msra.mxu0 %v1763
    %1902 = vmatprep.subr.mxu0 0.0
    %1903 = vmatpush1.msra.mxu0 %v1764
    %1904 = vmatprep.subr.mxu0 0.0
    %1905 = vmatpush1.msra.mxu0 %v1765
    %1906 = vmatprep.subr.mxu0 0.0
    %1907 = vmatpush1.msra.mxu0 %v1766
    %1908 = vmatprep.subr.mxu0 0.0
    %1909 = vmatpush1.msra.mxu0 %v1767
    %1910 = vmatprep.subr.mxu0 0.0
    %1911 = vmatpush1.msra.mxu0 %v1768
    %1912 = vmatprep.subr.mxu0 0.0
    %1913 = vmatpush1.msra.mxu0 %v1769
    %1914 = vmatprep.subr.mxu0 0.0
    %1915 = vmatpush1.msra.mxu0 %v1770
    %1916 = vmatprep.subr.mxu0 0.0
    %1917 = vmatpush1.msra.mxu0 %v1771
    %1918 = vmatprep.subr.mxu0 0.0
    %1919 = vmatpush1.msra.mxu0 %v1772
    %1920 = vmatprep.mubr.f32.mxu0 %v1848
    %1921 = vmatmul.mubr.f32.gmra.mrb[0].mxu0 %v1846
    %v1922 = vpop.f32.mrb[0].mxu0
    %v1923 = vadd.f32 0.0, %v1922
    %v1924 = vpop.f32.mrb[0].mxu0
    %1925 = vmatprep.mubr.f32.mxu0 %v1854
    %1926 = vmatmul.mubr.f32.gmra.mrb[0].mxu0 %v1852
    %v1927 = vpop.f32.mrb[0].mxu0
    %v1928 = vadd.f32 0.0, %v1927
    %v1929 = vpop.f32.mrb[0].mxu0
    %1930 = vdwg.mxu0
    %v1932 = vrot.slane %v1923, 2
    %v1934 = vrot.slane %v1923, 4
    %v1936 = vrot.slane %v1923, 6
    %v1938 = vld [vmem:[#allocation8] sm:$0xff]
    %v1939 = vld [vmem:[#allocation8 + $0x8] sm:$0xff]
    %v1940 = vld [vmem:[#allocation8 + $0x10] sm:$0xff]
    %v1941 = vld [vmem:[#allocation8 + $0x18] sm:$0xff]
    %v1942 = vld [vmem:[#allocation8 + $0x20] sm:$0xff]
    %v1943 = vld [vmem:[#allocation8 + $0x28] sm:$0xff]
    %v1944 = vld [vmem:[#allocation8 + $0x30] sm:$0xff]
    %v1945 = vld [vmem:[#allocation8 + $0x38] sm:$0xff]
    %v1946 = vld [vmem:[#allocation8 + $0x40] sm:$0xff]
    %v1947 = vld [vmem:[#allocation8 + $0x48] sm:$0xff]
    %v1948 = vld [vmem:[#allocation8 + $0x50] sm:$0xff]
    %v1949 = vld [vmem:[#allocation8 + $0x58] sm:$0xff]
    %v1950 = vld [vmem:[#allocation8 + $0x60] sm:$0xff]
    %v1951 = vld [vmem:[#allocation8 + $0x68] sm:$0xff]
    %v1952 = vld [vmem:[#allocation8 + $0x70] sm:$0xff]
    %v1953 = vld [vmem:[#allocation8 + $0x78] sm:$0xff]
    %v1954 = vld [vmem:[#allocation8 + $0x80] sm:$0xff]
    %v1955 = vld [vmem:[#allocation8 + $0x88] sm:$0xff]
    %v1956 = vld [vmem:[#allocation8 + $0x90] sm:$0xff]
    %v1957 = vld [vmem:[#allocation8 + $0x98] sm:$0xff]
    %v1958 = vld [vmem:[#allocation8 + $0xa0] sm:$0xff]
    %v1959 = vld [vmem:[#allocation8 + $0xa8] sm:$0xff]
    %v1960 = vld [vmem:[#allocation8 + $0xb0] sm:$0xff]
    %v1961 = vld [vmem:[#allocation8 + $0xb8] sm:$0xff]
    %v1962 = vld [vmem:[#allocation8 + $0xc0] sm:$0xff]
    %v1963 = vld [vmem:[#allocation8 + $0xc8] sm:$0xff]
    %v1964 = vld [vmem:[#allocation8 + $0xd0] sm:$0xff]
    %v1965 = vld [vmem:[#allocation8 + $0xd8] sm:$0xff]
    %v1966 = vld [vmem:[#allocation8 + $0xe0] sm:$0xff]
    %v1967 = vld [vmem:[#allocation8 + $0xe8] sm:$0xff]
    %v1968 = vld [vmem:[#allocation8 + $0xf0] sm:$0xff]
    %v1969 = vld [vmem:[#allocation8 + $0xf8] sm:$0xff]
    %v1970 = vld [vmem:[#allocation8 + $0x100] sm:$0xff]
    %v1971 = vld [vmem:[#allocation8 + $0x108] sm:$0xff]
    %v1972 = vld [vmem:[#allocation8 + $0x110] sm:$0xff]
    %v1973 = vld [vmem:[#allocation8 + $0x118] sm:$0xff]
    %v1974 = vld [vmem:[#allocation8 + $0x120] sm:$0xff]
    %v1975 = vld [vmem:[#allocation8 + $0x128] sm:$0xff]
    %v1976 = vld [vmem:[#allocation8 + $0x130] sm:$0xff]
    %v1977 = vld [vmem:[#allocation8 + $0x138] sm:$0xff]
    %v1978 = vld [vmem:[#allocation8 + $0x140] sm:$0xff]
    %v1979 = vld [vmem:[#allocation8 + $0x148] sm:$0xff]
    %v1980 = vld [vmem:[#allocation8 + $0x150] sm:$0xff]
    %v1981 = vld [vmem:[#allocation8 + $0x158] sm:$0xff]
    %v1982 = vld [vmem:[#allocation8 + $0x160] sm:$0xff]
    %v1983 = vld [vmem:[#allocation8 + $0x168] sm:$0xff]
    %v1984 = vld [vmem:[#allocation8 + $0x170] sm:$0xff]
    %v1985 = vld [vmem:[#allocation8 + $0x178] sm:$0xff]
    %v1986 = vld [vmem:[#allocation8 + $0x180] sm:$0xff]
    %v1987 = vld [vmem:[#allocation8 + $0x188] sm:$0xff]
    %v1988 = vld [vmem:[#allocation8 + $0x190] sm:$0xff]
    %v1989 = vld [vmem:[#allocation8 + $0x198] sm:$0xff]
    %v1990 = vld [vmem:[#allocation8 + $0x1a0] sm:$0xff]
    %v1991 = vld [vmem:[#allocation8 + $0x1a8] sm:$0xff]
    %v1992 = vld [vmem:[#allocation8 + $0x1b0] sm:$0xff]
    %v1993 = vld [vmem:[#allocation8 + $0x1b8] sm:$0xff]
    %v1994 = vld [vmem:[#allocation8 + $0x1c0] sm:$0xff]
    %v1995 = vld [vmem:[#allocation8 + $0x1c8] sm:$0xff]
    %v1996 = vld [vmem:[#allocation8 + $0x1d0] sm:$0xff]
    %v1997 = vld [vmem:[#allocation8 + $0x1d8] sm:$0xff]
    %v1998 = vld [vmem:[#allocation8 + $0x1e0] sm:$0xff]
    %v1999 = vld [vmem:[#allocation8 + $0x1e8] sm:$0xff]
    %v2000 = vld [vmem:[#allocation8 + $0x1f0] sm:$0xff]
    %v2001 = vld [vmem:[#allocation8 + $0x1f8] sm:$0xff]
    %v2002 = vld [vmem:[#allocation8 + $0x200] sm:$0xff]
    %v2003 = vld [vmem:[#allocation8 + $0x208] sm:$0xff]
    %v2004 = vld [vmem:[#allocation8 + $0x210] sm:$0xff]
    %v2005 = vld [vmem:[#allocation8 + $0x218] sm:$0xff]
    %v2006 = vld [vmem:[#allocation8 + $0x220] sm:$0xff]
    %v2007 = vld [vmem:[#allocation8 + $0x228] sm:$0xff]
    %v2008 = vld [vmem:[#allocation8 + $0x230] sm:$0xff]
    %v2009 = vld [vmem:[#allocation8 + $0x238] sm:$0xff]
    %v2010 = vld [vmem:[#allocation8 + $0x240] sm:$0xff]
    %v2011 = vld [vmem:[#allocation8 + $0x248] sm:$0xff]
    %v2012 = vld [vmem:[#allocation8 + $0x250] sm:$0xff]
    %v2013 = vld [vmem:[#allocation8 + $0x258] sm:$0xff]
    %v2014 = vld [vmem:[#allocation8 + $0x260] sm:$0xff]
    %v2015 = vld [vmem:[#allocation8 + $0x268] sm:$0xff]
    %v2016 = vld [vmem:[#allocation8 + $0x270] sm:$0xff]
    %v2017 = vld [vmem:[#allocation8 + $0x278] sm:$0xff]
    %v2018 = vld [vmem:[#allocation8 + $0x280] sm:$0x1]
    %v2019 = vlaneseq
    %v2020 = vshrl.u32 %v2019, 7
    %v2021 = vsub.s32 0, %v2020
    %v2022 = vrot.slane %v2018, %v2021
    %2023 = vmatprep.subr.mxu0 0.0
    %2024 = vmatpush1.msra.mxu0 %v1938
    %2025 = vmatprep.subr.mxu0 0.0
    %2026 = vmatpush1.msra.mxu0 %v1939
    %2027 = vmatprep.subr.mxu0 0.0
    %2028 = vmatpush1.msra.mxu0 %v1940
    %2029 = vmatprep.subr.mxu0 0.0
    %2030 = vmatpush1.msra.mxu0 %v1941
    %2031 = vmatprep.subr.mxu0 0.0
    %2032 = vmatpush1.msra.mxu0 %v1942
    %2033 = vmatprep.subr.mxu0 0.0
    %2034 = vmatpush1.msra.mxu0 %v1943
    %2035 = vmatprep.subr.mxu0 0.0
    %2036 = vmatpush1.msra.mxu0 %v1944
    %2037 = vmatprep.subr.mxu0 0.0
    %2038 = vmatpush1.msra.mxu0 %v1945
    %2039 = vmatprep.subr.mxu0 0.0
    %2040 = vmatpush1.msra.mxu0 %v1946
    %2041 = vmatprep.subr.mxu0 0.0
    %2042 = vmatpush1.msra.mxu0 %v1947
    %2043 = vmatprep.subr.mxu0 0.0
    %2044 = vmatpush1.msra.mxu0 %v1948
    %2045 = vmatprep.subr.mxu0 0.0
    %2046 = vmatpush1.msra.mxu0 %v1949
    %2047 = vmatprep.subr.mxu0 0.0
    %2048 = vmatpush1.msra.mxu0 %v1950
    %2049 = vmatprep.subr.mxu0 0.0
    %2050 = vmatpush1.msra.mxu0 %v1951
    %2051 = vmatprep.subr.mxu0 0.0
    %2052 = vmatpush1.msra.mxu0 %v1952
    %2053 = vmatprep.subr.mxu0 0.0
    %2054 = vmatpush1.msra.mxu0 %v1953
    %2055 = vmatprep.subr.mxu0 0.0
    %2056 = vmatpush1.msra.mxu0 %v1954
    %2057 = vmatprep.subr.mxu0 0.0
    %2058 = vmatpush1.msra.mxu0 %v1955
    %2059 = vmatprep.subr.mxu0 0.0
    %2060 = vmatpush1.msra.mxu0 %v1956
    %2061 = vmatprep.subr.mxu0 0.0
    %2062 = vmatpush1.msra.mxu0 %v1957
    %2063 = vmatprep.subr.mxu0 0.0
    %2064 = vmatpush1.msra.mxu0 %v1958
    %2065 = vmatprep.subr.mxu0 0.0
    %2066 = vmatpush1.msra.mxu0 %v1959
    %2067 = vmatprep.subr.mxu0 0.0
    %2068 = vmatpush1.msra.mxu0 %v1960
    %2069 = vmatprep.subr.mxu0 0.0
    %2070 = vmatpush1.msra.mxu0 %v1961
    %2071 = vmatprep.subr.mxu0 0.0
    %2072 = vmatpush1.msra.mxu0 %v1962
    %2073 = vmatprep.subr.mxu0 0.0
    %2074 = vmatpush1.msra.mxu0 %v1963
    %2075 = vmatprep.subr.mxu0 0.0
    %2076 = vmatpush1.msra.mxu0 %v1964
    %2077 = vmatprep.subr.mxu0 0.0
    %2078 = vmatpush1.msra.mxu0 %v1965
    %2079 = vmatprep.subr.mxu0 0.0
    %2080 = vmatpush1.msra.mxu0 %v1966
    %2081 = vmatprep.subr.mxu0 0.0
    %2082 = vmatpush1.msra.mxu0 %v1967
    %2083 = vmatprep.subr.mxu0 0.0
    %2084 = vmatpush1.msra.mxu0 %v1968
    %2085 = vmatprep.subr.mxu0 0.0
    %2086 = vmatpush1.msra.mxu0 %v1969
    %2087 = vmatprep.mubr.f32.mxu0 %v1932
    %2088 = vmatmul.mubr.f32.gmra.mrb[0].mxu0 %v1923
    %v2089 = vpop.f32.mrb[0].mxu0
    %v2090 = vadd.f32 %v2022, %v2089
    %v2091 = vpop.f32.mrb[0].mxu0
    %2092 = vdwg.mxu0
    %2093 = vmatprep.subr.mxu0 0.0
    %2094 = vmatpush1.msra.mxu0 %v1970
    %2095 = vmatprep.subr.mxu0 0.0
    %2096 = vmatpush1.msra.mxu0 %v1971
    %2097 = vmatprep.subr.mxu0 0.0
    %2098 = vmatpush1.msra.mxu0 %v1972
    %2099 = vmatprep.subr.mxu0 0.0
    %2100 = vmatpush1.msra.mxu0 %v1973
    %2101 = vmatprep.subr.mxu0 0.0
    %2102 = vmatpush1.msra.mxu0 %v1974
    %2103 = vmatprep.subr.mxu0 0.0
    %2104 = vmatpush1.msra.mxu0 %v1975
    %2105 = vmatprep.subr.mxu0 0.0
    %2106 = vmatpush1.msra.mxu0 %v1976
    %2107 = vmatprep.subr.mxu0 0.0
    %2108 = vmatpush1.msra.mxu0 %v1977
    %2109 = vmatprep.subr.mxu0 0.0
    %2110 = vmatpush1.msra.mxu0 %v1978
    %2111 = vmatprep.subr.mxu0 0.0
    %2112 = vmatpush1.msra.mxu0 %v1979
    %2113 = vmatprep.subr.mxu0 0.0
    %2114 = vmatpush1.msra.mxu0 %v1980
    %2115 = vmatprep.subr.mxu0 0.0
    %2116 = vmatpush1.msra.mxu0 %v1981
    %2117 = vmatprep.subr.mxu0 0.0
    %2118 = vmatpush1.msra.mxu0 %v1982
    %2119 = vmatprep.subr.mxu0 0.0
    %2120 = vmatpush1.msra.mxu0 %v1983
    %2121 = vmatprep.subr.mxu0 0.0
    %2122 = vmatpush1.msra.mxu0 %v1984
    %2123 = vmatprep.subr.mxu0 0.0
    %2124 = vmatpush1.msra.mxu0 %v1985
    %2125 = vmatprep.subr.mxu0 0.0
    %2126 = vmatpush1.msra.mxu0 %v1986
    %2127 = vmatprep.subr.mxu0 0.0
    %2128 = vmatpush1.msra.mxu0 %v1987
    %2129 = vmatprep.subr.mxu0 0.0
    %2130 = vmatpush1.msra.mxu0 %v1988
    %2131 = vmatprep.subr.mxu0 0.0
    %2132 = vmatpush1.msra.mxu0 %v1989
    %2133 = vmatprep.subr.mxu0 0.0
    %2134 = vmatpush1.msra.mxu0 %v1990
    %2135 = vmatprep.subr.mxu0 0.0
    %2136 = vmatpush1.msra.mxu0 %v1991
    %2137 = vmatprep.subr.mxu0 0.0
    %2138 = vmatpush1.msra.mxu0 %v1992
    %2139 = vmatprep.subr.mxu0 0.0
    %2140 = vmatpush1.msra.mxu0 %v1993
    %2141 = vmatprep.subr.mxu0 0.0
    %2142 = vmatpush1.msra.mxu0 %v1994
    %2143 = vmatprep.subr.mxu0 0.0
    %2144 = vmatpush1.msra.mxu0 %v1995
    %2145 = vmatprep.subr.mxu0 0.0
    %2146 = vmatpush1.msra.mxu0 %v1996
    %2147 = vmatprep.subr.mxu0 0.0
    %2148 = vmatpush1.msra.mxu0 %v1997
    %2149 = vmatprep.subr.mxu0 0.0
    %2150 = vmatpush1.msra.mxu0 %v1998
    %2151 = vmatprep.subr.mxu0 0.0
    %2152 = vmatpush1.msra.mxu0 %v1999
    %2153 = vmatprep.subr.mxu0 0.0
    %2154 = vmatpush1.msra.mxu0 %v2000
    %2155 = vmatprep.subr.mxu0 0.0
    %2156 = vmatpush1.msra.mxu0 %v2001
    %2157 = vmatprep.mubr.f32.mxu0 %v1936
    %2158 = vmatmul.mubr.f32.gmra.mrb[0].mxu0 %v1934
    %v2159 = vpop.f32.mrb[0].mxu0
    %v2160 = vadd.f32 %v2090, %v2159
    %v2161 = vpop.f32.mrb[0].mxu0
    %2162 = vdwg.mxu0
    %2163 = vmatprep.subr.mxu0 0.0
    %2164 = vmatpush1.msra.mxu0 %v2002
    %2165 = vmatprep.subr.mxu0 0.0
    %2166 = vmatpush1.msra.mxu0 %v2003
    %2167 = vmatprep.subr.mxu0 0.0
    %2168 = vmatpush1.msra.mxu0 %v2004
    %2169 = vmatprep.subr.mxu0 0.0
    %2170 = vmatpush1.msra.mxu0 %v2005
    %2171 = vmatprep.subr.mxu0 0.0
    %2172 = vmatpush1.msra.mxu0 %v2006
    %2173 = vmatprep.subr.mxu0 0.0
    %2174 = vmatpush1.msra.mxu0 %v2007
    %2175 = vmatprep.subr.mxu0 0.0
    %2176 = vmatpush1.msra.mxu0 %v2008
    %2177 = vmatprep.subr.mxu0 0.0
    %2178 = vmatpush1.msra.mxu0 %v2009
    %2179 = vmatprep.subr.mxu0 0.0
    %2180 = vmatpush1.msra.mxu0 %v2010
    %2181 = vmatprep.subr.mxu0 0.0
    %2182 = vmatpush1.msra.mxu0 %v2011
    %2183 = vmatprep.subr.mxu0 0.0
    %2184 = vmatpush1.msra.mxu0 %v2012
    %2185 = vmatprep.subr.mxu0 0.0
    %2186 = vmatpush1.msra.mxu0 %v2013
    %2187 = vmatprep.subr.mxu0 0.0
    %2188 = vmatpush1.msra.mxu0 %v2014
    %2189 = vmatprep.subr.mxu0 0.0
    %2190 = vmatpush1.msra.mxu0 %v2015
    %2191 = vmatprep.subr.mxu0 0.0
    %2192 = vmatpush1.msra.mxu0 %v2016
    %2193 = vmatprep.subr.mxu0 0.0
    %2194 = vmatpush1.msra.mxu0 %v2017
    %2195 = vmatprep.subr.mxu0 0.0
    %2196 = vmatpush1.msra.mxu0 0.0
    %2197 = vmatprep.subr.mxu0 0.0
    %2198 = vmatpush1.msra.mxu0 0.0
    %2199 = vmatprep.subr.mxu0 0.0
    %2200 = vmatpush1.msra.mxu0 0.0
    %2201 = vmatprep.subr.mxu0 0.0
    %2202 = vmatpush1.msra.mxu0 0.0
    %2203 = vmatprep.subr.mxu0 0.0
    %2204 = vmatpush1.msra.mxu0 0.0
    %2205 = vmatprep.subr.mxu0 0.0
    %2206 = vmatpush1.msra.mxu0 0.0
    %2207 = vmatprep.subr.mxu0 0.0
    %2208 = vmatpush1.msra.mxu0 0.0
    %2209 = vmatprep.subr.mxu0 0.0
    %2210 = vmatpush1.msra.mxu0 0.0
    %2211 = vmatprep.subr.mxu0 0.0
    %2212 = vmatpush1.msra.mxu0 0.0
    %2213 = vmatprep.subr.mxu0 0.0
    %2214 = vmatpush1.msra.mxu0 0.0
    %2215 = vmatprep.subr.mxu0 0.0
    %2216 = vmatpush1.msra.mxu0 0.0
    %2217 = vmatprep.subr.mxu0 0.0
    %2218 = vmatpush1.msra.mxu0 0.0
    %2219 = vmatprep.subr.mxu0 0.0
    %2220 = vmatpush1.msra.mxu0 0.0
    %2221 = vmatprep.subr.mxu0 0.0
    %2222 = vmatpush1.msra.mxu0 0.0
    %2223 = vmatprep.subr.mxu0 0.0
    %2224 = vmatpush1.msra.mxu0 0.0
    %2225 = vmatprep.subr.mxu0 0.0
    %2226 = vmatpush1.msra.mxu0 0.0
    %2227 = vmatprep.mubr.f32.mxu0 0.0
    %2228 = vmatmul.mubr.f32.gmra.mrb[0].mxu0 %v1928
    %v2229 = vpop.f32.mrb[0].mxu0
    %v2230 = vadd.f32 %v2160, %v2229
    %v2231 = vpop.f32.mrb[0].mxu0
    %2232 = vdwg.mxu0
    %v2233 = vmax.f32 %v2230, 0.0
    %v2234 = vld [vmem:[#allocation8 + $0x288] sm:$0xff]
    %v2235 = vld [vmem:[#allocation8 + $0x290] sm:$0xff]
    %v2236 = vld [vmem:[#allocation8 + $0x298] sm:$0xff]
    %v2237 = vld [vmem:[#allocation8 + $0x2a0] sm:$0xff]
    %v2238 = vld [vmem:[#allocation8 + $0x2a8] sm:$0x1]
    %v2239 = vlaneseq
    %v2240 = vshrl.u32 %v2239, 7
    %v2241 = vsub.s32 0, %v2240
    %v2242 = vrot.slane %v2238, %v2241
    %v2244 = vsel %vm117, %v2233, 0
    %2246 = vmatprep.subr.mxu0 0.0
    %2247 = vmatpush1.msra.mxu0 %v2234
    %2248 = vmatprep.subr.mxu0 0.0
    %2249 = vmatpush1.msra.mxu0 %v2235
    %2250 = vmatprep.subr.mxu0 0.0
    %2251 = vmatpush1.msra.mxu0 %v2236
    %2252 = vmatprep.subr.mxu0 0.0
    %2253 = vmatpush1.msra.mxu0 %v2237
    %2254 = vmatprep.subr.mxu0 0.0
    %2255 = vmatpush1.msra.mxu0 0.0
    %2256 = vmatprep.subr.mxu0 0.0
    %2257 = vmatpush1.msra.mxu0 0.0
    %2258 = vmatprep.subr.mxu0 0.0
    %2259 = vmatpush1.msra.mxu0 0.0
    %2260 = vmatprep.subr.mxu0 0.0
    %2261 = vmatpush1.msra.mxu0 0.0
    %2262 = vmatprep.subr.mxu0 0.0
    %2263 = vmatpush1.msra.mxu0 0.0
    %2264 = vmatprep.subr.mxu0 0.0
    %2265 = vmatpush1.msra.mxu0 0.0
    %2266 = vmatprep.subr.mxu0 0.0
    %2267 = vmatpush1.msra.mxu0 0.0
    %2268 = vmatprep.subr.mxu0 0.0
    %2269 = vmatpush1.msra.mxu0 0.0
    %2270 = vmatprep.subr.mxu0 0.0
    %2271 = vmatpush1.msra.mxu0 0.0
    %2272 = vmatprep.subr.mxu0 0.0
    %2273 = vmatpush1.msra.mxu0 0.0
    %2274 = vmatprep.subr.mxu0 0.0
    %2275 = vmatpush1.msra.mxu0 0.0
    %2276 = vmatprep.subr.mxu0 0.0
    %2277 = vmatpush1.msra.mxu0 0.0
    %2278 = vmatprep.subr.mxu0 0.0
    %2279 = vmatpush1.msra.mxu0 0.0
    %2280 = vmatprep.subr.mxu0 0.0
    %2281 = vmatpush1.msra.mxu0 0.0
    %2282 = vmatprep.subr.mxu0 0.0
    %2283 = vmatpush1.msra.mxu0 0.0
    %2284 = vmatprep.subr.mxu0 0.0
    %2285 = vmatpush1.msra.mxu0 0.0
    %2286 = vmatprep.subr.mxu0 0.0
    %2287 = vmatpush1.msra.mxu0 0.0
    %2288 = vmatprep.subr.mxu0 0.0
    %2289 = vmatpush1.msra.mxu0 0.0
    %2290 = vmatprep.subr.mxu0 0.0
    %2291 = vmatpush1.msra.mxu0 0.0
    %2292 = vmatprep.subr.mxu0 0.0
    %2293 = vmatpush1.msra.mxu0 0.0
    %2294 = vmatprep.subr.mxu0 0.0
    %2295 = vmatpush1.msra.mxu0 0.0
    %2296 = vmatprep.subr.mxu0 0.0
    %2297 = vmatpush1.msra.mxu0 0.0
    %2298 = vmatprep.subr.mxu0 0.0
    %2299 = vmatpush1.msra.mxu0 0.0
    %2300 = vmatprep.subr.mxu0 0.0
    %2301 = vmatpush1.msra.mxu0 0.0
    %2302 = vmatprep.subr.mxu0 0.0
    %2303 = vmatpush1.msra.mxu0 0.0
    %2304 = vmatprep.subr.mxu0 0.0
    %2305 = vmatpush1.msra.mxu0 0.0
    %2306 = vmatprep.subr.mxu0 0.0
    %2307 = vmatpush1.msra.mxu0 0.0
    %2308 = vmatprep.subr.mxu0 0.0
    %2309 = vmatpush1.msra.mxu0 0.0
    %2310 = vmatprep.mubr.f32.mxu0 0.0
    %2311 = vmatmul.mubr.f32.gmra.mrb[0].mxu0 %v2244
    %v2312 = vpop.f32.mrb[0].mxu0
    %v2313 = vadd.f32 %v2242, %v2312
    %v2314 = vpop.f32.mrb[0].mxu0
    %2315 = vdwg.mxu0
    %v2316 = vmax.f32 %v2313, 0.0
    %v2317 = vld [vmem:[#allocation8 + $0x2b0] sm:$0xff]
    %v2318 = vld [vmem:[#allocation8 + $0x2b8] sm:$0xff]
    %v2319 = vld [vmem:[#allocation8 + $0x2c0] sm:$0x1]
    %v2320 = vlaneseq
    %v2321 = vshrl.u32 %v2320, 7
    %v2322 = vsub.s32 0, %v2321
    %v2323 = vrot.slane %v2319, %v2322
    %vm2324 = vcmask 130048
    %v2326 = vsel %vm2324, %v2316, 0
    %2328 = vmatprep.subr.mxu0 0.0
    %2329 = vmatpush1.msra.mxu0 %v2317
    %2330 = vmatprep.subr.mxu0 0.0
    %2331 = vmatpush1.msra.mxu0 %v2318
    %2332 = vmatprep.subr.mxu0 0.0
    %2333 = vmatpush1.msra.mxu0 0.0
    %2334 = vmatprep.subr.mxu0 0.0
    %2335 = vmatpush1.msra.mxu0 0.0
    %2336 = vmatprep.subr.mxu0 0.0
    %2337 = vmatpush1.msra.mxu0 0.0
    %2338 = vmatprep.subr.mxu0 0.0
    %2339 = vmatpush1.msra.mxu0 0.0
    %2340 = vmatprep.subr.mxu0 0.0
    %2341 = vmatpush1.msra.mxu0 0.0
    %2342 = vmatprep.subr.mxu0 0.0
    %2343 = vmatpush1.msra.mxu0 0.0
    %2344 = vmatprep.subr.mxu0 0.0
    %2345 = vmatpush1.msra.mxu0 0.0
    %2346 = vmatprep.subr.mxu0 0.0
    %2347 = vmatpush1.msra.mxu0 0.0
    %2348 = vmatprep.subr.mxu0 0.0
    %2349 = vmatpush1.msra.mxu0 0.0
    %2350 = vmatprep.subr.mxu0 0.0
    %2351 = vmatpush1.msra.mxu0 0.0
    %2352 = vmatprep.subr.mxu0 0.0
    %2353 = vmatpush1.msra.mxu0 0.0
    %2354 = vmatprep.subr.mxu0 0.0
    %2355 = vmatpush1.msra.mxu0 0.0
    %2356 = vmatprep.subr.mxu0 0.0
    %2357 = vmatpush1.msra.mxu0 0.0
    %2358 = vmatprep.subr.mxu0 0.0
    %2359 = vmatpush1.msra.mxu0 0.0
    %2360 = vmatprep.subr.mxu0 0.0
    %2361 = vmatpush1.msra.mxu0 0.0
    %2362 = vmatprep.subr.mxu0 0.0
    %2363 = vmatpush1.msra.mxu0 0.0
    %2364 = vmatprep.subr.mxu0 0.0
    %2365 = vmatpush1.msra.mxu0 0.0
    %2366 = vmatprep.subr.mxu0 0.0
    %2367 = vmatpush1.msra.mxu0 0.0
    %2368 = vmatprep.subr.mxu0 0.0
    %2369 = vmatpush1.msra.mxu0 0.0
    %2370 = vmatprep.subr.mxu0 0.0
    %2371 = vmatpush1.msra.mxu0 0.0
    %2372 = vmatprep.subr.mxu0 0.0
    %2373 = vmatpush1.msra.mxu0 0.0
    %2374 = vmatprep.subr.mxu0 0.0
    %2375 = vmatpush1.msra.mxu0 0.0
    %2376 = vmatprep.subr.mxu0 0.0
    %2377 = vmatpush1.msra.mxu0 0.0
    %2378 = vmatprep.subr.mxu0 0.0
    %2379 = vmatpush1.msra.mxu0 0.0
    %2380 = vmatprep.subr.mxu0 0.0
    %2381 = vmatpush1.msra.mxu0 0.0
    %2382 = vmatprep.subr.mxu0 0.0
    %2383 = vmatpush1.msra.mxu0 0.0
    %2384 = vmatprep.subr.mxu0 0.0
    %2385 = vmatpush1.msra.mxu0 0.0
    %2386 = vmatprep.subr.mxu0 0.0
    %2387 = vmatpush1.msra.mxu0 0.0
    %2388 = vmatprep.subr.mxu0 0.0
    %2389 = vmatpush1.msra.mxu0 0.0
    %2390 = vmatprep.subr.mxu0 0.0
    %2391 = vmatpush1.msra.mxu0 0.0
    %2392 = vmatprep.mubr.f32.mxu0 0.0
    %2393 = vmatmul.mubr.f32.gmra.mrb[0].mxu0 %v2326
    %v2394 = vpop.f32.mrb[0].mxu0
    %v2395 = vadd.f32 %v2323, %v2394
    %v2396 = vpop.f32.mrb[0].mxu0
    %2397 = vdwg.mxu0
    %vm2398 = vcmask 17408
    %2399 = vst.msk [vmem:[#allocation10] sm:$0x3] %vm2398, %v2395
    // Predicated region
    $region34: #{forward.1} parent=1 // pred_check
      _
    $region35: #{forward.1} parent=1 // pred_check_branch
      %2401 = sbr.rel (0) target = $region37
    $region36: #{forward.1} parent=1 // pred_region
      %s2403 = ssub.s32 32, 32
      %2404 = vsyncadd [#allocation4], %s2403
      %s2406 = sshll.u32 [#allocation10], 4
      %s2407 = int_to_ptr.vmem [resolvable:$true] %s2406
      %2409 = dma.vmem_to_hbm [thread:$0]  %s2407, 32, %s4, [#allocation4]
    $region37: #{forward.1} parent=1 // pred_fallthru
      _
    // Predicated region
    $region38: #{forward.1} parent=1 // pred_check
      _
    $region39: #{forward.1} parent=1 // pred_check_branch
      %2411 = sbr.rel (0) target = $region41
    $region40: #{forward.1} parent=1 // pred_region
      %2412 = dma.done [#allocation4], 32
    $region41: #{forward.1} parent=1 // pred_fallthru
      _
    %2413 = vsyncpa [#allocation3], 1
    %2414 = vsyncpa [#allocation6], 1
    %2415 = vsyncpa [#allocation9], 1
    %2416 = vsyncpa [#allocation4], 1

</llo_original>
